<compile_context>
chip_gen: v5e
topology: v5e:2x2
jax: 0.10.0
libtpu: 0.0.40
codegen_flags: <defaults>
</compile_context>

<pallas_src>
import functools

import jax
import jax.numpy as jnp
from jax.experimental import pallas as pl
from jax.experimental.pallas import tpu as pltpu


_TAPS = tuple((dy, dx) for dy in (-1, 0, 1) for dx in (-1, 0, 1))


# ---------------------------------------------------------------------------
# Fused Pallas kernel: whole forward (all images) in one invocation
# ---------------------------------------------------------------------------

def _fused_densenet_kernel(*refs, W, N, growth, num_layers):
    """refs layout:
      [0] x_ref          (C_pad, N)    f32   channels on sublanes, batch*HW on lanes
      [1] masks_ref      (9, 1, N)     f32   precomputed 0/1 validity per 3x3 tap
      [2] w_stem_ref     (G, 9*C_pad)  bf16  K-stacked stem weights (BN scale folded)
      [3] stem_shift_ref (G, 1)        f32
      [4+3l+0] w_l       (G, 9*ch_l)   bf16  K-stacked layer weights (exact K)
      [4+3l+1] s_l       (ch_l, 1)     f32   BN scale
      [4+3l+2] b_l       (ch_l, 1)     f32   BN shift
      [-4] final_scale   (C_f, 1)      f32
      [-3] final_shift   (C_f, 1)      f32
      [-2] o_ref         (C_f, N)      f32   output
      [-1] feats_ref     (C_f, N)      f32   VMEM scratch feature bank
    """
    x_ref, masks_ref, w_stem_ref, stem_shift_ref = refs[0:4]
    layer_refs = refs[4:4 + 3 * num_layers]
    final_scale_ref = refs[4 + 3 * num_layers]
    final_shift_ref = refs[5 + 3 * num_layers]
    o_ref = refs[6 + 3 * num_layers]
    feats_ref = refs[7 + 3 * num_layers]

    G = growth

    def conv3x3(a, w_ref):
        # a: (C, N) f32 activations.  w_ref: (G, 9*C) bf16 with column k = tap*C + c.
        # The 9 lane-rolled (XLU), edge-masked taps are stacked along the
        # contraction axis so each conv is a SINGLE MXU matmul.
        taps = []
        for t, (dy, dx) in enumerate(_TAPS):
            off = dy * W + dx
            rolled = a if off == 0 else pltpu.roll(a, shift=(-off) % N, axis=1)
            taps.append(rolled * masks_ref[t])                       # (C, N) f32
        stacked = jnp.concatenate(taps, axis=0).astype(jnp.bfloat16)  # (9*C, N)
        return jnp.dot(w_ref[...], stacked,
                       preferred_element_type=jnp.float32)            # (G, N) f32

    # --- stem: conv3x3 (BN scale pre-folded into weights) -> +shift -> ReLU --
    h = conv3x3(x_ref[...], w_stem_ref)
    feats_ref[0:G, :] = jnp.maximum(h + stem_shift_ref[...], 0.0)

    # --- dense block: BN -> ReLU -> conv3x3; "concat" = write into scratch ---
    ch = G
    for l in range(num_layers):
        w_ref = layer_refs[3 * l]
        s_ref = layer_refs[3 * l + 1]
        b_ref = layer_refs[3 * l + 2]
        a = jnp.maximum(feats_ref[0:ch, :] * s_ref[...] + b_ref[...], 0.0)
        feats_ref[ch:ch + G, :] = conv3x3(a, w_ref)
        ch += G

    # --- final BN (norm5) fused with the module-level ReLU --------------------
    o_ref[...] = jnp.maximum(
        feats_ref[...] * final_scale_ref[...] + final_shift_ref[...], 0.0)


# ---------------------------------------------------------------------------
# Parameter construction (deterministic, synthetic stand-in weights)
# ---------------------------------------------------------------------------

def _bn_scale_shift(key, c, eps=1e-5):
    k1, k2, k3, k4 = jax.random.split(key, 4)
    gamma = 1.0 + 0.1 * jax.random.normal(k1, (c,), jnp.float32)
    beta = 0.1 * jax.random.normal(k2, (c,), jnp.float32)
    mean = 0.1 * jax.random.normal(k3, (c,), jnp.float32)
    var = 0.5 + 0.1 * jnp.abs(jax.random.normal(k4, (c,), jnp.float32))
    scale = gamma / jnp.sqrt(var + eps)
    shift = beta - mean * scale
    return scale, shift


def _conv3x3_kstacked(key, cin, cout, cpad=None):
    """PyTorch-layout (cout, cin, 3, 3) -> K-stacked (cout, 9*cpad) f32,
    column index k = tap*cpad + c with tap = (dy+1)*3 + (dx+1)."""
    cpad = cin if cpad is None else cpad
    w = jax.random.normal(key, (cout, cin, 3, 3), jnp.float32)
    w = w * (1.0 / (3.0 * (float(cin) ** 0.5)))
    wk = jnp.transpose(w, (0, 2, 3, 1))                     # (cout, ky, kx, cin)
    if cpad > cin:
        wk = jnp.pad(wk, ((0, 0), (0, 0), (0, 0), (0, cpad - cin)))
    return wk.reshape(cout, 9 * cpad)


def init_params(key, cin=4, growth=8, num_layers=2):
    cin_pad = ((cin + 7) // 8) * 8          # sublane-align the stem input channels
    c_final = growth * (num_layers + 1)
    keys = jax.random.split(key, 2 + 2 * num_layers + 1)

    params = {
        "growth": growth,
        "num_layers": num_layers,
        "cin": cin,
        "cin_pad": cin_pad,
        "out_channels": c_final,
    }

    # Stem: fold the BN scale into the conv weights; only the shift stays in-kernel.
    w_stem = _conv3x3_kstacked(keys[0], cin, growth, cpad=cin_pad)   # (G, 9*cin_pad)
    s, b = _bn_scale_shift(keys[1], growth)
    params["stem_w"] = (w_stem * s[:, None]).astype(jnp.bfloat16)
    params["stem_shift"] = b.reshape(growth, 1)

    # Dense-block layers: exact per-layer K = 9*ch (no padding to c_final).
    layers = []
    ch = growth
    for l in range(num_layers):
        s, b = _bn_scale_shift(keys[2 + 2 * l], ch)
        w = _conv3x3_kstacked(keys[3 + 2 * l], ch, growth).astype(jnp.bfloat16)
        layers.append({"w": w, "scale": s.reshape(ch, 1), "shift": b.reshape(ch, 1)})
        ch += growth
    params["layers"] = layers

    fs, fb = _bn_scale_shift(keys[-1], c_final)
    params["final_scale"] = fs.reshape(c_final, 1)
    params["final_shift"] = fb.reshape(c_final, 1)
    return params


# ---------------------------------------------------------------------------
# Forward wrapper: features(x) followed by ReLU (the module's forward)
# ---------------------------------------------------------------------------

def _build_masks(batch, H, W):
    """(9, 1, batch*H*W) 0/1 validity masks for the 3x3 taps; image boundaries
    (and hence cross-image roll wrap) are masked out."""
    HW = H * W
    N = batch * HW
    p = jnp.arange(N, dtype=jnp.int32) % HW     # per-image spatial index
    wp = p % W
    hp = p // W
    ms = []
    for dy, dx in _TAPS:
        valid = ((wp + dx >= 0) & (wp + dx < W) &
                 (hp + dy >= 0) & (hp + dy < H))
        ms.append(valid)
    return jnp.stack(ms, axis=0).astype(jnp.float32).reshape(9, 1, N)


def densenet_last_layer_forward(x_nchw, params):
    B, C_in, H, W = x_nchw.shape
    HW = H * W
    N = B * HW
    G = params["growth"]
    L = params["num_layers"]
    C_f = params["out_channels"]
    c_pad = params["cin_pad"]

    # NCHW -> (C, B*H*W): batch folded into the lane axis so the whole forward
    # is a single kernel invocation; lane count N stays a multiple of 128.
    xr = jnp.transpose(x_nchw, (1, 0, 2, 3)).reshape(C_in, N).astype(jnp.float32)
    if c_pad > C_in:
        xr = jnp.pad(xr, ((0, c_pad - C_in), (0, 0)))

    masks = _build_masks(B, H, W)                           # (9, 1, N) f32

    layer_args = []
    for lyr in params["layers"]:
        layer_args += [lyr["w"], lyr["scale"], lyr["shift"]]

    kernel = functools.partial(
        _fused_densenet_kernel, W=W, N=N, growth=G, num_layers=L)

    # Advisory cost estimate: kernel is launch/overhead bound, not roofline bound.
    flops = 2 * G * (9 * c_pad) * N
    weight_bytes = params["stem_w"].size * 2
    for lyr in params["layers"]:
        flops += 2 * G * lyr["w"].shape[1] * N
        weight_bytes += lyr["w"].size * 2
    bytes_accessed = xr.size * 4 + masks.size * 4 + weight_bytes + C_f * N * 4

    vmem = pl.BlockSpec(memory_space=pltpu.MemorySpace.VMEM)
    out = pl.pallas_call(
        kernel,
        out_shape=jax.ShapeDtypeStruct((C_f, N), jnp.float32),
        in_specs=[vmem] * (4 + 3 * L + 2),
        out_specs=vmem,
        scratch_shapes=[pltpu.VMEM((C_f, N), jnp.float32)],
        cost_estimate=pl.CostEstimate(
            flops=flops, transcendentals=0, bytes_accessed=bytes_accessed),
    )(
        xr, masks, params["stem_w"], params["stem_shift"],
        *layer_args, params["final_scale"], params["final_shift"],
    )

    # (C_f, B*H*W) -> NCHW.
    return jnp.transpose(out.reshape(C_f, B, H, W), (1, 0, 2, 3))


if __name__ == "__main__":
    key = jax.random.PRNGKey(0)
    kx, kp = jax.random.split(key)

    B, C, H, W = 2, 4, 16, 16
    x = jax.random.normal(kx, (B, C, H, W), jnp.float32)
    params = init_params(kp, cin=C, growth=8, num_layers=2)

    fwd = jax.jit(functools.partial(densenet_last_layer_forward, params=params))
    out = jax.block_until_ready(fwd(x))

    assert out.shape == (B, params["out_channels"], H, W), out.shape
    assert bool(jnp.all(out >= 0.0)), "ReLU output must be non-negative"
    assert bool(jnp.all(jnp.isfinite(out))), "output must be finite"
    print("KERNEL_OK")
</pallas_src>

<mosaic_0001>
module attributes {stable_mosaic.version = 11 : i64} {
  func.func @_fused_densenet_kernel(%arg0: memref<8x512xf32, #tpu.memory_space<vmem>>, %arg1: memref<9x1x512xf32, #tpu.memory_space<vmem>>, %arg2: memref<8x72xbf16, #tpu.memory_space<vmem>>, %arg3: memref<8x1xf32, #tpu.memory_space<vmem>>, %arg4: memref<8x72xbf16, #tpu.memory_space<vmem>>, %arg5: memref<8x1xf32, #tpu.memory_space<vmem>>, %arg6: memref<8x1xf32, #tpu.memory_space<vmem>>, %arg7: memref<8x144xbf16, #tpu.memory_space<vmem>>, %arg8: memref<16x1xf32, #tpu.memory_space<vmem>>, %arg9: memref<16x1xf32, #tpu.memory_space<vmem>>, %arg10: memref<24x1xf32, #tpu.memory_space<vmem>>, %arg11: memref<24x1xf32, #tpu.memory_space<vmem>>, %arg12: memref<24x512xf32, #tpu.memory_space<vmem>>, %arg13: memref<24x512xf32, #tpu.memory_space<vmem>>) attributes {dimension_semantics = [], scalar_prefetch = 0 : i64, scratch_operands = 1 : i64, tpu.core_type = #tpu.core_type<tc>} {
    %c0 = arith.constant 0 : index
    %c0_0 = arith.constant 0 : index
    %0 = vector.load %arg0[%c0, %c0_0] : memref<8x512xf32, #tpu.memory_space<vmem>>, vector<8x512xf32>
    %c17_i32 = arith.constant 17 : i32
    %1 = tpu.dynamic_rotate %0 by %c17_i32 dim 1 : vector<8x512xf32>, i32 -> vector<8x512xf32>
    %c0_1 = arith.constant 0 : index
    %c0_2 = arith.constant 0 : index
    %c0_3 = arith.constant 0 : index
    %2 = vector.load %arg1[%c0_1, %c0_2, %c0_3] : memref<9x1x512xf32, #tpu.memory_space<vmem>>, vector<1x1x512xf32>
    %3 = vector.shape_cast %2 : vector<1x1x512xf32> to vector<1x512xf32>
    %4 = vector.broadcast %3 : vector<1x512xf32> to vector<8x512xf32>
    %5 = arith.mulf %1, %4 : vector<8x512xf32>
    %c16_i32 = arith.constant 16 : i32
    %6 = tpu.dynamic_rotate %0 by %c16_i32 dim 1 : vector<8x512xf32>, i32 -> vector<8x512xf32>
    %c1 = arith.constant 1 : index
    %c0_4 = arith.constant 0 : index
    %c0_5 = arith.constant 0 : index
    %7 = vector.load %arg1[%c1, %c0_4, %c0_5] : memref<9x1x512xf32, #tpu.memory_space<vmem>>, vector<1x1x512xf32>
    %8 = vector.shape_cast %7 : vector<1x1x512xf32> to vector<1x512xf32>
    %9 = vector.broadcast %8 : vector<1x512xf32> to vector<8x512xf32>
    %10 = arith.mulf %6, %9 : vector<8x512xf32>
    %c15_i32 = arith.constant 15 : i32
    %11 = tpu.dynamic_rotate %0 by %c15_i32 dim 1 : vector<8x512xf32>, i32 -> vector<8x512xf32>
    %c2 = arith.constant 2 : index
    %c0_6 = arith.constant 0 : index
    %c0_7 = arith.constant 0 : index
    %12 = vector.load %arg1[%c2, %c0_6, %c0_7] : memref<9x1x512xf32, #tpu.memory_space<vmem>>, vector<1x1x512xf32>
    %13 = vector.shape_cast %12 : vector<1x1x512xf32> to vector<1x512xf32>
    %14 = vector.broadcast %13 : vector<1x512xf32> to vector<8x512xf32>
    %15 = arith.mulf %11, %14 : vector<8x512xf32>
    %c1_i32 = arith.constant 1 : i32
    %16 = tpu.dynamic_rotate %0 by %c1_i32 dim 1 : vector<8x512xf32>, i32 -> vector<8x512xf32>
    %c3 = arith.constant 3 : index
    %c0_8 = arith.constant 0 : index
    %c0_9 = arith.constant 0 : index
    %17 = vector.load %arg1[%c3, %c0_8, %c0_9] : memref<9x1x512xf32, #tpu.memory_space<vmem>>, vector<1x1x512xf32>
    %18 = vector.shape_cast %17 : vector<1x1x512xf32> to vector<1x512xf32>
    %19 = vector.broadcast %18 : vector<1x512xf32> to vector<8x512xf32>
    %20 = arith.mulf %16, %19 : vector<8x512xf32>
    %c4 = arith.constant 4 : index
    %c0_10 = arith.constant 0 : index
    %c0_11 = arith.constant 0 : index
    %21 = vector.load %arg1[%c4, %c0_10, %c0_11] : memref<9x1x512xf32, #tpu.memory_space<vmem>>, vector<1x1x512xf32>
    %22 = vector.shape_cast %21 : vector<1x1x512xf32> to vector<1x512xf32>
    %23 = vector.broadcast %22 : vector<1x512xf32> to vector<8x512xf32>
    %24 = arith.mulf %0, %23 : vector<8x512xf32>
    %c511_i32 = arith.constant 511 : i32
    %25 = tpu.dynamic_rotate %0 by %c511_i32 dim 1 : vector<8x512xf32>, i32 -> vector<8x512xf32>
    %c5 = arith.constant 5 : index
    %c0_12 = arith.constant 0 : index
    %c0_13 = arith.constant 0 : index
    %26 = vector.load %arg1[%c5, %c0_12, %c0_13] : memref<9x1x512xf32, #tpu.memory_space<vmem>>, vector<1x1x512xf32>
    %27 = vector.shape_cast %26 : vector<1x1x512xf32> to vector<1x512xf32>
    %28 = vector.broadcast %27 : vector<1x512xf32> to vector<8x512xf32>
    %29 = arith.mulf %25, %28 : vector<8x512xf32>
    %c497_i32 = arith.constant 497 : i32
    %30 = tpu.dynamic_rotate %0 by %c497_i32 dim 1 : vector<8x512xf32>, i32 -> vector<8x512xf32>
    %c6 = arith.constant 6 : index
    %c0_14 = arith.constant 0 : index
    %c0_15 = arith.constant 0 : index
    %31 = vector.load %arg1[%c6, %c0_14, %c0_15] : memref<9x1x512xf32, #tpu.memory_space<vmem>>, vector<1x1x512xf32>
    %32 = vector.shape_cast %31 : vector<1x1x512xf32> to vector<1x512xf32>
    %33 = vector.broadcast %32 : vector<1x512xf32> to vector<8x512xf32>
    %34 = arith.mulf %30, %33 : vector<8x512xf32>
    %c496_i32 = arith.constant 496 : i32
    %35 = tpu.dynamic_rotate %0 by %c496_i32 dim 1 : vector<8x512xf32>, i32 -> vector<8x512xf32>
    %c7 = arith.constant 7 : index
    %c0_16 = arith.constant 0 : index
    %c0_17 = arith.constant 0 : index
    %36 = vector.load %arg1[%c7, %c0_16, %c0_17] : memref<9x1x512xf32, #tpu.memory_space<vmem>>, vector<1x1x512xf32>
    %37 = vector.shape_cast %36 : vector<1x1x512xf32> to vector<1x512xf32>
    %38 = vector.broadcast %37 : vector<1x512xf32> to vector<8x512xf32>
    %39 = arith.mulf %35, %38 : vector<8x512xf32>
    %c495_i32 = arith.constant 495 : i32
    %40 = tpu.dynamic_rotate %0 by %c495_i32 dim 1 : vector<8x512xf32>, i32 -> vector<8x512xf32>
    %c8 = arith.constant 8 : index
    %c0_18 = arith.constant 0 : index
    %c0_19 = arith.constant 0 : index
    %41 = vector.load %arg1[%c8, %c0_18, %c0_19] : memref<9x1x512xf32, #tpu.memory_space<vmem>>, vector<1x1x512xf32>
    %42 = vector.shape_cast %41 : vector<1x1x512xf32> to vector<1x512xf32>
    %43 = vector.broadcast %42 : vector<1x512xf32> to vector<8x512xf32>
    %44 = arith.mulf %40, %43 : vector<8x512xf32>
    %45 = tpu.concatenate %5, %10, %15, %20, %24, %29, %34, %39, %44 in 0 : vector<8x512xf32>, vector<8x512xf32>, vector<8x512xf32>, vector<8x512xf32>, vector<8x512xf32>, vector<8x512xf32>, vector<8x512xf32>, vector<8x512xf32>, vector<8x512xf32> -> vector<72x512xf32>
    %46 = arith.truncf %45 : vector<72x512xf32> to vector<72x512xbf16>
    %c0_20 = arith.constant 0 : index
    %c0_21 = arith.constant 0 : index
    %47 = vector.load %arg2[%c0_20, %c0_21] : memref<8x72xbf16, #tpu.memory_space<vmem>>, vector<8x72xbf16>
    %cst = arith.constant dense<0.000000e+00> : vector<8x512xf32>
    %48 = tpu.matmul %47, %46, %cst {dimension_numbers = #tpu.dot_dimension_numbers<[1], [0], [0], [1], [0, 0, 1, 1], [], []>} : vector<8x72xbf16>, vector<72x512xbf16>, vector<8x512xf32> -> vector<8x512xf32>
    %c0_22 = arith.constant 0 : index
    %c0_23 = arith.constant 0 : index
    %49 = vector.load %arg3[%c0_22, %c0_23] : memref<8x1xf32, #tpu.memory_space<vmem>>, vector<8x1xf32>
    %50 = vector.broadcast %49 : vector<8x1xf32> to vector<8x512xf32>
    %51 = arith.addf %48, %50 : vector<8x512xf32>
    %cst_24 = arith.constant 0.000000e+00 : f32
    %52 = vector.broadcast %cst_24 : f32 to vector<8x512xf32>
    %53 = arith.maximumf %51, %52 : vector<8x512xf32>
    %c0_25 = arith.constant 0 : index
    %c0_26 = arith.constant 0 : index
    %54 = vector.load %arg13[%c0_25, %c0_26] : memref<24x512xf32, #tpu.memory_space<vmem>>, vector<8x512xf32>
    tpu.vector_store %arg13[%c0_25, %c0_26], %53 {strides = array<i32>} : memref<24x512xf32, #tpu.memory_space<vmem>>, vector<8x512xf32>,
    %c0_27 = arith.constant 0 : index
    %c0_28 = arith.constant 0 : index
    %55 = vector.load %arg13[%c0_27, %c0_28] : memref<24x512xf32, #tpu.memory_space<vmem>>, vector<8x512xf32>
    %c0_29 = arith.constant 0 : index
    %c0_30 = arith.constant 0 : index
    %56 = vector.load %arg5[%c0_29, %c0_30] : memref<8x1xf32, #tpu.memory_space<vmem>>, vector<8x1xf32>
    %57 = vector.broadcast %56 : vector<8x1xf32> to vector<8x512xf32>
    %58 = arith.mulf %55, %57 : vector<8x512xf32>
    %c0_31 = arith.constant 0 : index
    %c0_32 = arith.constant 0 : index
    %59 = vector.load %arg6[%c0_31, %c0_32] : memref<8x1xf32, #tpu.memory_space<vmem>>, vector<8x1xf32>
    %60 = vector.broadcast %59 : vector<8x1xf32> to vector<8x512xf32>
    %61 = arith.addf %58, %60 : vector<8x512xf32>
    %cst_33 = arith.constant 0.000000e+00 : f32
    %62 = vector.broadcast %cst_33 : f32 to vector<8x512xf32>
    %63 = arith.maximumf %61, %62 : vector<8x512xf32>
    %c17_i32_34 = arith.constant 17 : i32
    %64 = tpu.dynamic_rotate %63 by %c17_i32_34 dim 1 : vector<8x512xf32>, i32 -> vector<8x512xf32>
    %c0_35 = arith.constant 0 : index
    %c0_36 = arith.constant 0 : index
    %c0_37 = arith.constant 0 : index
    %65 = vector.load %arg1[%c0_35, %c0_36, %c0_37] : memref<9x1x512xf32, #tpu.memory_space<vmem>>, vector<1x1x512xf32>
    %66 = vector.shape_cast %65 : vector<1x1x512xf32> to vector<1x512xf32>
    %67 = vector.broadcast %66 : vector<1x512xf32> to vector<8x512xf32>
    %68 = arith.mulf %64, %67 : vector<8x512xf32>
    %c16_i32_38 = arith.constant 16 : i32
    %69 = tpu.dynamic_rotate %63 by %c16_i32_38 dim 1 : vector<8x512xf32>, i32 -> vector<8x512xf32>
    %c1_39 = arith.constant 1 : index
    %c0_40 = arith.constant 0 : index
    %c0_41 = arith.constant 0 : index
    %70 = vector.load %arg1[%c1_39, %c0_40, %c0_41] : memref<9x1x512xf32, #tpu.memory_space<vmem>>, vector<1x1x512xf32>
    %71 = vector.shape_cast %70 : vector<1x1x512xf32> to vector<1x512xf32>
    %72 = vector.broadcast %71 : vector<1x512xf32> to vector<8x512xf32>
    %73 = arith.mulf %69, %72 : vector<8x512xf32>
    %c15_i32_42 = arith.constant 15 : i32
    %74 = tpu.dynamic_rotate %63 by %c15_i32_42 dim 1 : vector<8x512xf32>, i32 -> vector<8x512xf32>
    %c2_43 = arith.constant 2 : index
    %c0_44 = arith.constant 0 : index
    %c0_45 = arith.constant 0 : index
    %75 = vector.load %arg1[%c2_43, %c0_44, %c0_45] : memref<9x1x512xf32, #tpu.memory_space<vmem>>, vector<1x1x512xf32>
    %76 = vector.shape_cast %75 : vector<1x1x512xf32> to vector<1x512xf32>
    %77 = vector.broadcast %76 : vector<1x512xf32> to vector<8x512xf32>
    %78 = arith.mulf %74, %77 : vector<8x512xf32>
    %c1_i32_46 = arith.constant 1 : i32
    %79 = tpu.dynamic_rotate %63 by %c1_i32_46 dim 1 : vector<8x512xf32>, i32 -> vector<8x512xf32>
    %c3_47 = arith.constant 3 : index
    %c0_48 = arith.constant 0 : index
    %c0_49 = arith.constant 0 : index
    %80 = vector.load %arg1[%c3_47, %c0_48, %c0_49] : memref<9x1x512xf32, #tpu.memory_space<vmem>>, vector<1x1x512xf32>
    %81 = vector.shape_cast %80 : vector<1x1x512xf32> to vector<1x512xf32>
    %82 = vector.broadcast %81 : vector<1x512xf32> to vector<8x512xf32>
    %83 = arith.mulf %79, %82 : vector<8x512xf32>
    %c4_50 = arith.constant 4 : index
    %c0_51 = arith.constant 0 : index
    %c0_52 = arith.constant 0 : index
    %84 = vector.load %arg1[%c4_50, %c0_51, %c0_52] : memref<9x1x512xf32, #tpu.memory_space<vmem>>, vector<1x1x512xf32>
    %85 = vector.shape_cast %84 : vector<1x1x512xf32> to vector<1x512xf32>
    %86 = vector.broadcast %85 : vector<1x512xf32> to vector<8x512xf32>
    %87 = arith.mulf %63, %86 : vector<8x512xf32>
    %c511_i32_53 = arith.constant 511 : i32
    %88 = tpu.dynamic_rotate %63 by %c511_i32_53 dim 1 : vector<8x512xf32>, i32 -> vector<8x512xf32>
    %c5_54 = arith.constant 5 : index
    %c0_55 = arith.constant 0 : index
    %c0_56 = arith.constant 0 : index
    %89 = vector.load %arg1[%c5_54, %c0_55, %c0_56] : memref<9x1x512xf32, #tpu.memory_space<vmem>>, vector<1x1x512xf32>
    %90 = vector.shape_cast %89 : vector<1x1x512xf32> to vector<1x512xf32>
    %91 = vector.broadcast %90 : vector<1x512xf32> to vector<8x512xf32>
    %92 = arith.mulf %88, %91 : vector<8x512xf32>
    %c497_i32_57 = arith.constant 497 : i32
    %93 = tpu.dynamic_rotate %63 by %c497_i32_57 dim 1 : vector<8x512xf32>, i32 -> vector<8x512xf32>
    %c6_58 = arith.constant 6 : index
    %c0_59 = arith.constant 0 : index
    %c0_60 = arith.constant 0 : index
    %94 = vector.load %arg1[%c6_58, %c0_59, %c0_60] : memref<9x1x512xf32, #tpu.memory_space<vmem>>, vector<1x1x512xf32>
    %95 = vector.shape_cast %94 : vector<1x1x512xf32> to vector<1x512xf32>
    %96 = vector.broadcast %95 : vector<1x512xf32> to vector<8x512xf32>
    %97 = arith.mulf %93, %96 : vector<8x512xf32>
    %c496_i32_61 = arith.constant 496 : i32
    %98 = tpu.dynamic_rotate %63 by %c496_i32_61 dim 1 : vector<8x512xf32>, i32 -> vector<8x512xf32>
    %c7_62 = arith.constant 7 : index
    %c0_63 = arith.constant 0 : index
    %c0_64 = arith.constant 0 : index
    %99 = vector.load %arg1[%c7_62, %c0_63, %c0_64] : memref<9x1x512xf32, #tpu.memory_space<vmem>>, vector<1x1x512xf32>
    %100 = vector.shape_cast %99 : vector<1x1x512xf32> to vector<1x512xf32>
    %101 = vector.broadcast %100 : vector<1x512xf32> to vector<8x512xf32>
    %102 = arith.mulf %98, %101 : vector<8x512xf32>
    %c495_i32_65 = arith.constant 495 : i32
    %103 = tpu.dynamic_rotate %63 by %c495_i32_65 dim 1 : vector<8x512xf32>, i32 -> vector<8x512xf32>
    %c8_66 = arith.constant 8 : index
    %c0_67 = arith.constant 0 : index
    %c0_68 = arith.constant 0 : index
    %104 = vector.load %arg1[%c8_66, %c0_67, %c0_68] : memref<9x1x512xf32, #tpu.memory_space<vmem>>, vector<1x1x512xf32>
    %105 = vector.shape_cast %104 : vector<1x1x512xf32> to vector<1x512xf32>
    %106 = vector.broadcast %105 : vector<1x512xf32> to vector<8x512xf32>
    %107 = arith.mulf %103, %106 : vector<8x512xf32>
    %108 = tpu.concatenate %68, %73, %78, %83, %87, %92, %97, %102, %107 in 0 : vector<8x512xf32>, vector<8x512xf32>, vector<8x512xf32>, vector<8x512xf32>, vector<8x512xf32>, vector<8x512xf32>, vector<8x512xf32>, vector<8x512xf32>, vector<8x512xf32> -> vector<72x512xf32>
    %109 = arith.truncf %108 : vector<72x512xf32> to vector<72x512xbf16>
    %c0_69 = arith.constant 0 : index
    %c0_70 = arith.constant 0 : index
    %110 = vector.load %arg4[%c0_69, %c0_70] : memref<8x72xbf16, #tpu.memory_space<vmem>>, vector<8x72xbf16>
    %cst_71 = arith.constant dense<0.000000e+00> : vector<8x512xf32>
    %111 = tpu.matmul %110, %109, %cst_71 {dimension_numbers = #tpu.dot_dimension_numbers<[1], [0], [0], [1], [0, 0, 1, 1], [], []>} : vector<8x72xbf16>, vector<72x512xbf16>, vector<8x512xf32> -> vector<8x512xf32>
    %c8_72 = arith.constant 8 : index
    %c0_73 = arith.constant 0 : index
    %112 = vector.load %arg13[%c8_72, %c0_73] : memref<24x512xf32, #tpu.memory_space<vmem>>, vector<8x512xf32>
    tpu.vector_store %arg13[%c8_72, %c0_73], %111 {strides = array<i32>} : memref<24x512xf32, #tpu.memory_space<vmem>>, vector<8x512xf32>,
    %c0_74 = arith.constant 0 : index
    %c0_75 = arith.constant 0 : index
    %113 = vector.load %arg13[%c0_74, %c0_75] : memref<24x512xf32, #tpu.memory_space<vmem>>, vector<16x512xf32>
    %c0_76 = arith.constant 0 : index
    %c0_77 = arith.constant 0 : index
    %114 = vector.load %arg8[%c0_76, %c0_77] : memref<16x1xf32, #tpu.memory_space<vmem>>, vector<16x1xf32>
    %115 = vector.broadcast %114 : vector<16x1xf32> to vector<16x512xf32>
    %116 = arith.mulf %113, %115 : vector<16x512xf32>
    %c0_78 = arith.constant 0 : index
    %c0_79 = arith.constant 0 : index
    %117 = vector.load %arg9[%c0_78, %c0_79] : memref<16x1xf32, #tpu.memory_space<vmem>>, vector<16x1xf32>
    %118 = vector.broadcast %117 : vector<16x1xf32> to vector<16x512xf32>
    %119 = arith.addf %116, %118 : vector<16x512xf32>
    %cst_80 = arith.constant 0.000000e+00 : f32
    %120 = vector.broadcast %cst_80 : f32 to vector<16x512xf32>
    %121 = arith.maximumf %119, %120 : vector<16x512xf32>
    %c17_i32_81 = arith.constant 17 : i32
    %122 = tpu.dynamic_rotate %121 by %c17_i32_81 dim 1 : vector<16x512xf32>, i32 -> vector<16x512xf32>
    %c0_82 = arith.constant 0 : index
    %c0_83 = arith.constant 0 : index
    %c0_84 = arith.constant 0 : index
    %123 = vector.load %arg1[%c0_82, %c0_83, %c0_84] : memref<9x1x512xf32, #tpu.memory_space<vmem>>, vector<1x1x512xf32>
    %124 = vector.shape_cast %123 : vector<1x1x512xf32> to vector<1x512xf32>
    %125 = vector.broadcast %124 : vector<1x512xf32> to vector<16x512xf32>
    %126 = arith.mulf %122, %125 : vector<16x512xf32>
    %c16_i32_85 = arith.constant 16 : i32
    %127 = tpu.dynamic_rotate %121 by %c16_i32_85 dim 1 : vector<16x512xf32>, i32 -> vector<16x512xf32>
    %c1_86 = arith.constant 1 : index
    %c0_87 = arith.constant 0 : index
    %c0_88 = arith.constant 0 : index
    %128 = vector.load %arg1[%c1_86, %c0_87, %c0_88] : memref<9x1x512xf32, #tpu.memory_space<vmem>>, vector<1x1x512xf32>
    %129 = vector.shape_cast %128 : vector<1x1x512xf32> to vector<1x512xf32>
    %130 = vector.broadcast %129 : vector<1x512xf32> to vector<16x512xf32>
    %131 = arith.mulf %127, %130 : vector<16x512xf32>
    %c15_i32_89 = arith.constant 15 : i32
    %132 = tpu.dynamic_rotate %121 by %c15_i32_89 dim 1 : vector<16x512xf32>, i32 -> vector<16x512xf32>
    %c2_90 = arith.constant 2 : index
    %c0_91 = arith.constant 0 : index
    %c0_92 = arith.constant 0 : index
    %133 = vector.load %arg1[%c2_90, %c0_91, %c0_92] : memref<9x1x512xf32, #tpu.memory_space<vmem>>, vector<1x1x512xf32>
    %134 = vector.shape_cast %133 : vector<1x1x512xf32> to vector<1x512xf32>
    %135 = vector.broadcast %134 : vector<1x512xf32> to vector<16x512xf32>
    %136 = arith.mulf %132, %135 : vector<16x512xf32>
    %c1_i32_93 = arith.constant 1 : i32
    %137 = tpu.dynamic_rotate %121 by %c1_i32_93 dim 1 : vector<16x512xf32>, i32 -> vector<16x512xf32>
    %c3_94 = arith.constant 3 : index
    %c0_95 = arith.constant 0 : index
    %c0_96 = arith.constant 0 : index
    %138 = vector.load %arg1[%c3_94, %c0_95, %c0_96] : memref<9x1x512xf32, #tpu.memory_space<vmem>>, vector<1x1x512xf32>
    %139 = vector.shape_cast %138 : vector<1x1x512xf32> to vector<1x512xf32>
    %140 = vector.broadcast %139 : vector<1x512xf32> to vector<16x512xf32>
    %141 = arith.mulf %137, %140 : vector<16x512xf32>
    %c4_97 = arith.constant 4 : index
    %c0_98 = arith.constant 0 : index
    %c0_99 = arith.constant 0 : index
    %142 = vector.load %arg1[%c4_97, %c0_98, %c0_99] : memref<9x1x512xf32, #tpu.memory_space<vmem>>, vector<1x1x512xf32>
    %143 = vector.shape_cast %142 : vector<1x1x512xf32> to vector<1x512xf32>
    %144 = vector.broadcast %143 : vector<1x512xf32> to vector<16x512xf32>
    %145 = arith.mulf %121, %144 : vector<16x512xf32>
    %c511_i32_100 = arith.constant 511 : i32
    %146 = tpu.dynamic_rotate %121 by %c511_i32_100 dim 1 : vector<16x512xf32>, i32 -> vector<16x512xf32>
    %c5_101 = arith.constant 5 : index
    %c0_102 = arith.constant 0 : index
    %c0_103 = arith.constant 0 : index
    %147 = vector.load %arg1[%c5_101, %c0_102, %c0_103] : memref<9x1x512xf32, #tpu.memory_space<vmem>>, vector<1x1x512xf32>
    %148 = vector.shape_cast %147 : vector<1x1x512xf32> to vector<1x512xf32>
    %149 = vector.broadcast %148 : vector<1x512xf32> to vector<16x512xf32>
    %150 = arith.mulf %146, %149 : vector<16x512xf32>
    %c497_i32_104 = arith.constant 497 : i32
    %151 = tpu.dynamic_rotate %121 by %c497_i32_104 dim 1 : vector<16x512xf32>, i32 -> vector<16x512xf32>
    %c6_105 = arith.constant 6 : index
    %c0_106 = arith.constant 0 : index
    %c0_107 = arith.constant 0 : index
    %152 = vector.load %arg1[%c6_105, %c0_106, %c0_107] : memref<9x1x512xf32, #tpu.memory_space<vmem>>, vector<1x1x512xf32>
    %153 = vector.shape_cast %152 : vector<1x1x512xf32> to vector<1x512xf32>
    %154 = vector.broadcast %153 : vector<1x512xf32> to vector<16x512xf32>
    %155 = arith.mulf %151, %154 : vector<16x512xf32>
    %c496_i32_108 = arith.constant 496 : i32
    %156 = tpu.dynamic_rotate %121 by %c496_i32_108 dim 1 : vector<16x512xf32>, i32 -> vector<16x512xf32>
    %c7_109 = arith.constant 7 : index
    %c0_110 = arith.constant 0 : index
    %c0_111 = arith.constant 0 : index
    %157 = vector.load %arg1[%c7_109, %c0_110, %c0_111] : memref<9x1x512xf32, #tpu.memory_space<vmem>>, vector<1x1x512xf32>
    %158 = vector.shape_cast %157 : vector<1x1x512xf32> to vector<1x512xf32>
    %159 = vector.broadcast %158 : vector<1x512xf32> to vector<16x512xf32>
    %160 = arith.mulf %156, %159 : vector<16x512xf32>
    %c495_i32_112 = arith.constant 495 : i32
    %161 = tpu.dynamic_rotate %121 by %c495_i32_112 dim 1 : vector<16x512xf32>, i32 -> vector<16x512xf32>
    %c8_113 = arith.constant 8 : index
    %c0_114 = arith.constant 0 : index
    %c0_115 = arith.constant 0 : index
    %162 = vector.load %arg1[%c8_113, %c0_114, %c0_115] : memref<9x1x512xf32, #tpu.memory_space<vmem>>, vector<1x1x512xf32>
    %163 = vector.shape_cast %162 : vector<1x1x512xf32> to vector<1x512xf32>
    %164 = vector.broadcast %163 : vector<1x512xf32> to vector<16x512xf32>
    %165 = arith.mulf %161, %164 : vector<16x512xf32>
    %166 = tpu.concatenate %126, %131, %136, %141, %145, %150, %155, %160, %165 in 0 : vector<16x512xf32>, vector<16x512xf32>, vector<16x512xf32>, vector<16x512xf32>, vector<16x512xf32>, vector<16x512xf32>, vector<16x512xf32>, vector<16x512xf32>, vector<16x512xf32> -> vector<144x512xf32>
    %167 = arith.truncf %166 : vector<144x512xf32> to vector<144x512xbf16>
    %c0_116 = arith.constant 0 : index
    %c0_117 = arith.constant 0 : index
    %168 = vector.load %arg7[%c0_116, %c0_117] : memref<8x144xbf16, #tpu.memory_space<vmem>>, vector<8x144xbf16>
    %cst_118 = arith.constant dense<0.000000e+00> : vector<8x512xf32>
    %169 = tpu.matmul %168, %167, %cst_118 {dimension_numbers = #tpu.dot_dimension_numbers<[1], [0], [0], [1], [0, 0, 1, 1], [], []>} : vector<8x144xbf16>, vector<144x512xbf16>, vector<8x512xf32> -> vector<8x512xf32>
    %c16 = arith.constant 16 : index
    %c0_119 = arith.constant 0 : index
    %170 = vector.load %arg13[%c16, %c0_119] : memref<24x512xf32, #tpu.memory_space<vmem>>, vector<8x512xf32>
    tpu.vector_store %arg13[%c16, %c0_119], %169 {strides = array<i32>} : memref<24x512xf32, #tpu.memory_space<vmem>>, vector<8x512xf32>,
    %c0_120 = arith.constant 0 : index
    %c0_121 = arith.constant 0 : index
    %171 = vector.load %arg13[%c0_120, %c0_121] : memref<24x512xf32, #tpu.memory_space<vmem>>, vector<24x512xf32>
    %c0_122 = arith.constant 0 : index
    %c0_123 = arith.constant 0 : index
    %172 = vector.load %arg10[%c0_122, %c0_123] : memref<24x1xf32, #tpu.memory_space<vmem>>, vector<24x1xf32>
    %173 = vector.broadcast %172 : vector<24x1xf32> to vector<24x512xf32>
    %174 = arith.mulf %171, %173 : vector<24x512xf32>
    %c0_124 = arith.constant 0 : index
    %c0_125 = arith.constant 0 : index
    %175 = vector.load %arg11[%c0_124, %c0_125] : memref<24x1xf32, #tpu.memory_space<vmem>>, vector<24x1xf32>
    %176 = vector.broadcast %175 : vector<24x1xf32> to vector<24x512xf32>
    %177 = arith.addf %174, %176 : vector<24x512xf32>
    %cst_126 = arith.constant 0.000000e+00 : f32
    %178 = vector.broadcast %cst_126 : f32 to vector<24x512xf32>
    %179 = arith.maximumf %177, %178 : vector<24x512xf32>
    %c0_127 = arith.constant 0 : index
    %c0_128 = arith.constant 0 : index
    %180 = vector.load %arg12[%c0_127, %c0_128] : memref<24x512xf32, #tpu.memory_space<vmem>>, vector<24x512xf32>
    tpu.vector_store %arg12[%c0_127, %c0_128], %179 {strides = array<i32>} : memref<24x512xf32, #tpu.memory_space<vmem>>, vector<24x512xf32>,
    return
  }
}

</mosaic_0001>

<llo_original>
// kernel: densenet_last_layer_forward.1
$region0: #{densenet_last_layer_forward.1}
  #allocation0 [shape = 'u32[]', space=smem, size = 0x4, offset = 0x4, fixed_abs, tag = 'smem constant byte address 0x4 - core index']
  #allocation1 [shape = 'u32[72,128]{1,0:T(1,128)}', space=vmem, size = 0x9000, scoped, tag = 'internal scratch']
  #allocation2 [shape = 'f32[24,512]{1,0:T(8,128)}', space=vmem, size = 0xc000, scoped, tag = 'scratch operand']
  %s0 = inlined_call_operand.vmem [shape: f32[8,512], index: 0, kind: input, shape index: {}]
  %s1 = inlined_call_operand.vmem [shape: f32[9,1,512], index: 1, kind: input, shape index: {}]
  %s2 = inlined_call_operand.vmem [shape: bf16[8,72], index: 2, kind: input, shape index: {}]
  %s3 = inlined_call_operand.vmem [shape: f32[8,1], index: 3, kind: input, shape index: {}]
  %s4 = inlined_call_operand.vmem [shape: bf16[8,72], index: 4, kind: input, shape index: {}]
  %s5 = inlined_call_operand.vmem [shape: f32[8,1], index: 5, kind: input, shape index: {}]
  %s6 = inlined_call_operand.vmem [shape: f32[8,1], index: 6, kind: input, shape index: {}]
  %s7 = inlined_call_operand.vmem [shape: bf16[8,144], index: 7, kind: input, shape index: {}]
  %s8 = inlined_call_operand.vmem [shape: f32[16,1], index: 8, kind: input, shape index: {}]
  %s9 = inlined_call_operand.vmem [shape: f32[16,1], index: 9, kind: input, shape index: {}]
  %s10 = inlined_call_operand.vmem [shape: f32[24,1], index: 10, kind: input, shape index: {}]
  %s11 = inlined_call_operand.vmem [shape: f32[24,1], index: 11, kind: input, shape index: {}]
  %s12 = inlined_call_operand.vmem [shape: f32[24,512], index: 12, kind: output, shape index: {}]
  %s13 = sld [smem:[#allocation0]]
  $region58: #{densenet_last_layer_forward.1} parent=0
    _
  %s15 = ssub.s32 1, %s13
  %s16 = scalar_select 0, %s15, %s13
  // Predicated region
  $region2: #{densenet_last_layer_forward.1} parent=0 // pred_check
    _
  $region3: #{densenet_last_layer_forward.1} parent=0 // pred_check_branch
    %18 = sbr.rel (0) target = $region5
  $region4: #{densenet_last_layer_forward.1} parent=0 // pred_region
    _
  $region5: #{densenet_last_layer_forward.1} parent=0 // pred_fallthru
    _
  // Predicated region
  $region6: #{densenet_last_layer_forward.1} parent=0 // pred_check
    _
  $region7: #{densenet_last_layer_forward.1} parent=0 // pred_check_branch
    %20 = sbr.rel (0) target = $region9
  $region8: #{densenet_last_layer_forward.1} parent=0 // pred_region
    _
  $region9: #{densenet_last_layer_forward.1} parent=0 // pred_fallthru
    _
  // Predicated region
  $region10: #{densenet_last_layer_forward.1} parent=0 // pred_check
    _
  $region11: #{densenet_last_layer_forward.1} parent=0 // pred_check_branch
    %22 = sbr.rel (0) target = $region13
  $region12: #{densenet_last_layer_forward.1} parent=0 // pred_region
    _
  $region13: #{densenet_last_layer_forward.1} parent=0 // pred_fallthru
    _
  // Predicated region
  $region14: #{densenet_last_layer_forward.1} parent=0 // pred_check
    _
  $region15: #{densenet_last_layer_forward.1} parent=0 // pred_check_branch
    %24 = sbr.rel (0) target = $region17
  $region16: #{densenet_last_layer_forward.1} parent=0 // pred_region
    _
  $region17: #{densenet_last_layer_forward.1} parent=0 // pred_fallthru
    _
  // Predicated region
  $region18: #{densenet_last_layer_forward.1} parent=0 // pred_check
    _
  $region19: #{densenet_last_layer_forward.1} parent=0 // pred_check_branch
    %26 = sbr.rel (0) target = $region21
  $region20: #{densenet_last_layer_forward.1} parent=0 // pred_region
    _
  $region21: #{densenet_last_layer_forward.1} parent=0 // pred_fallthru
    _
  // Predicated region
  $region22: #{densenet_last_layer_forward.1} parent=0 // pred_check
    _
  $region23: #{densenet_last_layer_forward.1} parent=0 // pred_check_branch
    %28 = sbr.rel (0) target = $region25
  $region24: #{densenet_last_layer_forward.1} parent=0 // pred_region
    _
  $region25: #{densenet_last_layer_forward.1} parent=0 // pred_fallthru
    _
  // Predicated region
  $region26: #{densenet_last_layer_forward.1} parent=0 // pred_check
    _
  $region27: #{densenet_last_layer_forward.1} parent=0 // pred_check_branch
    %30 = sbr.rel (0) target = $region29
  $region28: #{densenet_last_layer_forward.1} parent=0 // pred_region
    _
  $region29: #{densenet_last_layer_forward.1} parent=0 // pred_fallthru
    _
  // Predicated region
  $region30: #{densenet_last_layer_forward.1} parent=0 // pred_check
    _
  $region31: #{densenet_last_layer_forward.1} parent=0 // pred_check_branch
    %32 = sbr.rel (0) target = $region33
  $region32: #{densenet_last_layer_forward.1} parent=0 // pred_region
    _
  $region33: #{densenet_last_layer_forward.1} parent=0 // pred_fallthru
    _
  // Predicated region
  $region34: #{densenet_last_layer_forward.1} parent=0 // pred_check
    _
  $region35: #{densenet_last_layer_forward.1} parent=0 // pred_check_branch
    %34 = sbr.rel (0) target = $region37
  $region36: #{densenet_last_layer_forward.1} parent=0 // pred_region
    _
  $region37: #{densenet_last_layer_forward.1} parent=0 // pred_fallthru
    _
  // Predicated region
  $region38: #{densenet_last_layer_forward.1} parent=0 // pred_check
    _
  $region39: #{densenet_last_layer_forward.1} parent=0 // pred_check_branch
    %36 = sbr.rel (0) target = $region41
  $region40: #{densenet_last_layer_forward.1} parent=0 // pred_region
    _
  $region41: #{densenet_last_layer_forward.1} parent=0 // pred_fallthru
    _
  // Predicated region
  $region42: #{densenet_last_layer_forward.1} parent=0 // pred_check
    _
  $region43: #{densenet_last_layer_forward.1} parent=0 // pred_check_branch
    %38 = sbr.rel (0) target = $region45
  $region44: #{densenet_last_layer_forward.1} parent=0 // pred_region
    _
  $region45: #{densenet_last_layer_forward.1} parent=0 // pred_fallthru
    _
  // Predicated region
  $region46: #{densenet_last_layer_forward.1} parent=0 // pred_check
    _
  $region47: #{densenet_last_layer_forward.1} parent=0 // pred_check_branch
    %40 = sbr.rel (0) target = $region49
  $region48: #{densenet_last_layer_forward.1} parent=0 // pred_region
    _
  $region49: #{densenet_last_layer_forward.1} parent=0 // pred_fallthru
    _
  %v42 = vld [vmem:[%s0] sm:$0xff]
  %v43 = vld [vmem:[%s0 + $0x8] sm:$0xff]
  %v44 = vld [vmem:[%s0 + $0x10] sm:$0xff]
  %v45 = vld [vmem:[%s0 + $0x18] sm:$0xff]
  %46 = vrot.lane.b32.xlu0 %v42, 17
  %v47 = vpop.permute.xlu0 %46
  %48 = vrot.lane.b32.xlu0 %v43, 17
  %v49 = vpop.permute.xlu0 %48
  %50 = vrot.lane.b32.xlu0 %v44, 17
  %v51 = vpop.permute.xlu0 %50
  %52 = vrot.lane.b32.xlu0 %v45, 17
  %v53 = vpop.permute.xlu0 %52
  %v54 = vlaneseq
  %v55 = vand.u32 %v54, 127
  %vm56 = vcmp.lt.s32.totalorder %v55, 17
  %v57 = vsel %vm56, %v51, %v53
  %v58 = vsel %vm56, %v49, %v51
  %v59 = vsel %vm56, %v47, %v49
  %v60 = vsel %vm56, %v53, %v47
  %v61 = vld [vmem:[%s1] sm:$0xf]
  %v63 = vperm.slane %v61, 0
  %v64 = vperm.slane %v61, 1
  %v65 = vperm.slane %v61, 2
  %v66 = vperm.slane %v61, 3
  %v71 = vmul.f32 %v60, %v63
  %v72 = vmul.f32 %v59, %v64
  %v73 = vmul.f32 %v58, %v65
  %v74 = vmul.f32 %v57, %v66
  %75 = vrot.lane.b32.xlu0 %v42, 16
  %v76 = vpop.permute.xlu0 %75
  %77 = vrot.lane.b32.xlu0 %v43, 16
  %v78 = vpop.permute.xlu0 %77
  %79 = vrot.lane.b32.xlu0 %v44, 16
  %v80 = vpop.permute.xlu0 %79
  %81 = vrot.lane.b32.xlu0 %v45, 16
  %v82 = vpop.permute.xlu0 %81
  %vm83 = vcmp.lt.s32.totalorder %v55, 16
  %v84 = vsel %vm83, %v80, %v82
  %v85 = vsel %vm83, %v78, %v80
  %v86 = vsel %vm83, %v76, %v78
  %v87 = vsel %vm83, %v82, %v76
  %s88 = scalar_lea.vmem %s1, 4
  %v89 = vld [vmem:[%s88] sm:$0xf]
  %v91 = vperm.slane %v89, 0
  %v92 = vperm.slane %v89, 1
  %v93 = vperm.slane %v89, 2
  %v94 = vperm.slane %v89, 3
  %v99 = vmul.f32 %v87, %v91
  %v100 = vmul.f32 %v86, %v92
  %v101 = vmul.f32 %v85, %v93
  %v102 = vmul.f32 %v84, %v94
  %103 = vrot.lane.b32.xlu0 %v42, 15
  %v104 = vpop.permute.xlu0 %103
  %105 = vrot.lane.b32.xlu0 %v43, 15
  %v106 = vpop.permute.xlu0 %105
  %107 = vrot.lane.b32.xlu0 %v44, 15
  %v108 = vpop.permute.xlu0 %107
  %109 = vrot.lane.b32.xlu0 %v45, 15
  %v110 = vpop.permute.xlu0 %109
  %vm111 = vcmp.lt.s32.totalorder %v55, 15
  %v112 = vsel %vm111, %v108, %v110
  %v113 = vsel %vm111, %v106, %v108
  %v114 = vsel %vm111, %v104, %v106
  %v115 = vsel %vm111, %v110, %v104
  %s116 = scalar_lea.vmem %s1, 8
  %v117 = vld [vmem:[%s116] sm:$0xf]
  %v119 = vperm.slane %v117, 0
  %v120 = vperm.slane %v117, 1
  %v121 = vperm.slane %v117, 2
  %v122 = vperm.slane %v117, 3
  %v127 = vmul.f32 %v115, %v119
  %v128 = vmul.f32 %v114, %v120
  %v129 = vmul.f32 %v113, %v121
  %v130 = vmul.f32 %v112, %v122
  %131 = vrot.lane.b32.xlu0 %v42, 1
  %v132 = vpop.permute.xlu0 %131
  %133 = vrot.lane.b32.xlu0 %v43, 1
  %v134 = vpop.permute.xlu0 %133
  %135 = vrot.lane.b32.xlu0 %v44, 1
  %v136 = vpop.permute.xlu0 %135
  %137 = vrot.lane.b32.xlu0 %v45, 1
  %v138 = vpop.permute.xlu0 %137
  %vm139 = vcmp.lt.s32.totalorder %v55, 1
  %v140 = vsel %vm139, %v136, %v138
  %v141 = vsel %vm139, %v134, %v136
  %v142 = vsel %vm139, %v132, %v134
  %v143 = vsel %vm139, %v138, %v132
  %s144 = scalar_lea.vmem %s1, 12
  %v145 = vld [vmem:[%s144] sm:$0xf]
  %v147 = vperm.slane %v145, 0
  %v148 = vperm.slane %v145, 1
  %v149 = vperm.slane %v145, 2
  %v150 = vperm.slane %v145, 3
  %v155 = vmul.f32 %v143, %v147
  %v156 = vmul.f32 %v142, %v148
  %v157 = vmul.f32 %v141, %v149
  %v158 = vmul.f32 %v140, %v150
  %s159 = scalar_lea.vmem %s1, 16
  %v160 = vld [vmem:[%s159] sm:$0xf]
  %v162 = vperm.slane %v160, 0
  %v163 = vperm.slane %v160, 1
  %v164 = vperm.slane %v160, 2
  %v165 = vperm.slane %v160, 3
  %v170 = vmul.f32 %v42, %v162
  %v171 = vmul.f32 %v43, %v163
  %v172 = vmul.f32 %v44, %v164
  %v173 = vmul.f32 %v45, %v165
  %174 = vrot.lane.b32.xlu0 %v42, 127
  %v175 = vpop.permute.xlu0 %174
  %176 = vrot.lane.b32.xlu0 %v43, 127
  %v177 = vpop.permute.xlu0 %176
  %178 = vrot.lane.b32.xlu0 %v44, 127
  %v179 = vpop.permute.xlu0 %178
  %180 = vrot.lane.b32.xlu0 %v45, 127
  %v181 = vpop.permute.xlu0 %180
  %vm182 = vcmp.lt.s32.totalorder %v55, 127
  %v183 = vsel %vm182, %v179, %v181
  %v184 = vsel %vm182, %v177, %v179
  %v185 = vsel %vm182, %v175, %v177
  %v186 = vsel %vm182, %v181, %v175
  %s187 = scalar_lea.vmem %s1, 20
  %v188 = vld [vmem:[%s187] sm:$0xf]
  %v190 = vperm.slane %v188, 0
  %v191 = vperm.slane %v188, 1
  %v192 = vperm.slane %v188, 2
  %v193 = vperm.slane %v188, 3
  %v198 = vmul.f32 %v185, %v190
  %v199 = vmul.f32 %v184, %v191
  %v200 = vmul.f32 %v183, %v192
  %v201 = vmul.f32 %v186, %v193
  %202 = vrot.lane.b32.xlu0 %v42, 113
  %v203 = vpop.permute.xlu0 %202
  %204 = vrot.lane.b32.xlu0 %v43, 113
  %v205 = vpop.permute.xlu0 %204
  %206 = vrot.lane.b32.xlu0 %v44, 113
  %v207 = vpop.permute.xlu0 %206
  %208 = vrot.lane.b32.xlu0 %v45, 113
  %v209 = vpop.permute.xlu0 %208
  %vm210 = vcmp.lt.s32.totalorder %v55, 113
  %v211 = vsel %vm210, %v207, %v209
  %v212 = vsel %vm210, %v205, %v207
  %v213 = vsel %vm210, %v203, %v205
  %v214 = vsel %vm210, %v209, %v203
  %s215 = scalar_lea.vmem %s1, 24
  %v216 = vld [vmem:[%s215] sm:$0xf]
  %v218 = vperm.slane %v216, 0
  %v219 = vperm.slane %v216, 1
  %v220 = vperm.slane %v216, 2
  %v221 = vperm.slane %v216, 3
  %v226 = vmul.f32 %v213, %v218
  %v227 = vmul.f32 %v212, %v219
  %v228 = vmul.f32 %v211, %v220
  %v229 = vmul.f32 %v214, %v221
  %230 = vrot.lane.b32.xlu0 %v42, 112
  %v231 = vpop.permute.xlu0 %230
  %232 = vrot.lane.b32.xlu0 %v43, 112
  %v233 = vpop.permute.xlu0 %232
  %234 = vrot.lane.b32.xlu0 %v44, 112
  %v235 = vpop.permute.xlu0 %234
  %236 = vrot.lane.b32.xlu0 %v45, 112
  %v237 = vpop.permute.xlu0 %236
  %vm238 = vcmp.lt.s32.totalorder %v55, 112
  %v239 = vsel %vm238, %v235, %v237
  %v240 = vsel %vm238, %v233, %v235
  %v241 = vsel %vm238, %v231, %v233
  %v242 = vsel %vm238, %v237, %v231
  %s243 = scalar_lea.vmem %s1, 28
  %v244 = vld [vmem:[%s243] sm:$0xf]
  %v246 = vperm.slane %v244, 0
  %v247 = vperm.slane %v244, 1
  %v248 = vperm.slane %v244, 2
  %v249 = vperm.slane %v244, 3
  %v254 = vmul.f32 %v241, %v246
  %v255 = vmul.f32 %v240, %v247
  %v256 = vmul.f32 %v239, %v248
  %v257 = vmul.f32 %v242, %v249
  %258 = vrot.lane.b32.xlu0 %v42, 111
  %v259 = vpop.permute.xlu0 %258
  %260 = vrot.lane.b32.xlu0 %v43, 111
  %v261 = vpop.permute.xlu0 %260
  %262 = vrot.lane.b32.xlu0 %v44, 111
  %v263 = vpop.permute.xlu0 %262
  %264 = vrot.lane.b32.xlu0 %v45, 111
  %v265 = vpop.permute.xlu0 %264
  %vm266 = vcmp.lt.s32.totalorder %v55, 111
  %v267 = vsel %vm266, %v263, %v265
  %v268 = vsel %vm266, %v261, %v263
  %v269 = vsel %vm266, %v259, %v261
  %v270 = vsel %vm266, %v265, %v259
  %s271 = scalar_lea.vmem %s1, 32
  %v272 = vld [vmem:[%s271] sm:$0xf]
  %v274 = vperm.slane %v272, 0
  %v275 = vperm.slane %v272, 1
  %v276 = vperm.slane %v272, 2
  %v277 = vperm.slane %v272, 3
  %v282 = vmul.f32 %v269, %v274
  %v283 = vmul.f32 %v268, %v275
  %v284 = vmul.f32 %v267, %v276
  %v285 = vmul.f32 %v270, %v277
  %v286 = vpack.c.bf16 %v99, %v71
  %v287 = vpack.c.bf16 %v100, %v72
  %v288 = vpack.c.bf16 %v101, %v73
  %v289 = vpack.c.bf16 %v102, %v74
  %v290 = vpack.c.bf16 %v155, %v127
  %v291 = vpack.c.bf16 %v156, %v128
  %v292 = vpack.c.bf16 %v157, %v129
  %v293 = vpack.c.bf16 %v158, %v130
  %v294 = vpack.c.bf16 %v198, %v170
  %v295 = vpack.c.bf16 %v199, %v171
  %v296 = vpack.c.bf16 %v200, %v172
  %v297 = vpack.c.bf16 %v201, %v173
  %v298 = vpack.c.bf16 %v254, %v226
  %v299 = vpack.c.bf16 %v255, %v227
  %v300 = vpack.c.bf16 %v256, %v228
  %v301 = vpack.c.bf16 %v257, %v229
  %v302 = vpack.c.bf16 %v282, %v282
  %v303 = vpack.c.bf16 %v283, %v283
  %v304 = vpack.c.bf16 %v284, %v284
  %v305 = vpack.c.bf16 %v285, %v285
  %v306 = vld [vmem:[%s2] sm:$0xf]
  %v307 = vld [vmem:[%s3] sm:$0xff]
  %309 = vset.pattern.permute.xlu0 0
  %310 = vperm.xlu0 %309, %v307
  %v311 = vpop.permute.xlu0 %310
  %vm313 = vcmask 588800
  %v315 = vsel %vm313, %v306, 0
  %vm317 = vcmask 1043456
  %v319 = vsel %vm317, %v302, 0
  %v322 = vsel %vm317, %v303, 0
  %v325 = vsel %vm317, %v304, 0
  %v328 = vsel %vm317, %v305, 0
  %330 = vmatpush.bf16.msra.mxu0 0
  %331 = vmatpush.bf16.msra.mxu0 0
  %332 = vmatpush.bf16.msra.mxu0 0
  %333 = vmatpush.bf16.msra.mxu0 %v319
  %334 = vmatpush.bf16.msra.mxu0 %v298
  %335 = vmatpush.bf16.msra.mxu0 %v294
  %336 = vmatpush.bf16.msra.mxu0 %v290
  %337 = vmatpush.bf16.msra.mxu0 %v286
  %338 = vmatmul.bf16.gmra.mxu0 %v315
  %v339 = vpop.f32.mrf.mxu0
  %v340 = vadd.f32 %v311, %v339
  %v341 = vpop.f32.mrf.mxu0
  %342 = vdwg.mxu0
  %343 = vmatpush.bf16.msra.mxu0 0
  %344 = vmatpush.bf16.msra.mxu0 0
  %345 = vmatpush.bf16.msra.mxu0 0
  %346 = vmatpush.bf16.msra.mxu0 %v322
  %347 = vmatpush.bf16.msra.mxu0 %v299
  %348 = vmatpush.bf16.msra.mxu0 %v295
  %349 = vmatpush.bf16.msra.mxu0 %v291
  %350 = vmatpush.bf16.msra.mxu0 %v287
  %351 = vmatmul.bf16.gmra.mxu0 %v315
  %v352 = vpop.f32.mrf.mxu0
  %v353 = vadd.f32 %v311, %v352
  %v354 = vpop.f32.mrf.mxu0
  %355 = vdwg.mxu0
  %356 = vmatpush.bf16.msra.mxu0 0
  %357 = vmatpush.bf16.msra.mxu0 0
  %358 = vmatpush.bf16.msra.mxu0 0
  %359 = vmatpush.bf16.msra.mxu0 %v325
  %360 = vmatpush.bf16.msra.mxu0 %v300
  %361 = vmatpush.bf16.msra.mxu0 %v296
  %362 = vmatpush.bf16.msra.mxu0 %v292
  %363 = vmatpush.bf16.msra.mxu0 %v288
  %364 = vmatmul.bf16.gmra.mxu0 %v315
  %v365 = vpop.f32.mrf.mxu0
  %v366 = vadd.f32 %v311, %v365
  %v367 = vpop.f32.mrf.mxu0
  %368 = vdwg.mxu0
  %369 = vmatpush.bf16.msra.mxu0 0
  %370 = vmatpush.bf16.msra.mxu0 0
  %371 = vmatpush.bf16.msra.mxu0 0
  %372 = vmatpush.bf16.msra.mxu0 %v328
  %373 = vmatpush.bf16.msra.mxu0 %v301
  %374 = vmatpush.bf16.msra.mxu0 %v297
  %375 = vmatpush.bf16.msra.mxu0 %v293
  %376 = vmatpush.bf16.msra.mxu0 %v289
  %377 = vmatmul.bf16.gmra.mxu0 %v315
  %v378 = vpop.f32.mrf.mxu0
  %v379 = vadd.f32 %v311, %v378
  %v380 = vpop.f32.mrf.mxu0
  %381 = vdwg.mxu0
  %v382 = vmax.f32 %v340, 0.0
  %v383 = vmax.f32 %v353, 0.0
  %v384 = vmax.f32 %v366, 0.0
  %v385 = vmax.f32 %v379, 0.0
  %386 = vst [vmem:[#allocation2] sm:$0xff] %v382
  %387 = vst [vmem:[#allocation2 + $0x8] sm:$0xff] %v383
  %388 = vst [vmem:[#allocation2 + $0x10] sm:$0xff] %v384
  %389 = vst [vmem:[#allocation2 + $0x18] sm:$0xff] %v385
  %v390 = vld [vmem:[#allocation2] sm:$0xff]
  %v391 = vld [vmem:[#allocation2 + $0x8] sm:$0xff]
  %v392 = vld [vmem:[#allocation2 + $0x10] sm:$0xff]
  %v393 = vld [vmem:[#allocation2 + $0x18] sm:$0xff]
  %v394 = vld [vmem:[%s5] sm:$0xff]
  %396 = vset.pattern.permute.xlu0 0
  %397 = vperm.xlu0 %396, %v394
  %v398 = vpop.permute.xlu0 %397
  %v400 = vmul.f32 %v390, %v398
  %v401 = vmul.f32 %v391, %v398
  %v402 = vmul.f32 %v392, %v398
  %v403 = vmul.f32 %v393, %v398
  %v404 = vld [vmem:[%s6] sm:$0xff]
  %406 = vset.pattern.permute.xlu0 0
  %407 = vperm.xlu0 %406, %v404
  %v408 = vpop.permute.xlu0 %407
  %v410 = vadd.f32 %v400, %v408
  %v411 = vadd.f32 %v401, %v408
  %v412 = vadd.f32 %v402, %v408
  %v413 = vadd.f32 %v403, %v408
  %v414 = vmax.f32 %v410, 0.0
  %v415 = vmax.f32 %v411, 0.0
  %v416 = vmax.f32 %v412, 0.0
  %v417 = vmax.f32 %v413, 0.0
  %418 = vrot.lane.b32.xlu0 %v414, 17
  %v419 = vpop.permute.xlu0 %418
  %420 = vrot.lane.b32.xlu0 %v415, 17
  %v421 = vpop.permute.xlu0 %420
  %422 = vrot.lane.b32.xlu0 %v416, 17
  %v423 = vpop.permute.xlu0 %422
  %424 = vrot.lane.b32.xlu0 %v417, 17
  %v425 = vpop.permute.xlu0 %424
  %v426 = vsel %vm56, %v423, %v425
  %v427 = vsel %vm56, %v421, %v423
  %v428 = vsel %vm56, %v419, %v421
  %v429 = vsel %vm56, %v425, %v419
  %v430 = vld [vmem:[%s1] sm:$0xf]
  %v432 = vperm.slane %v430, 0
  %v433 = vperm.slane %v430, 1
  %v434 = vperm.slane %v430, 2
  %v435 = vperm.slane %v430, 3
  %v440 = vmul.f32 %v429, %v432
  %v441 = vmul.f32 %v428, %v433
  %v442 = vmul.f32 %v427, %v434
  %v443 = vmul.f32 %v426, %v435
  %444 = vrot.lane.b32.xlu0 %v414, 16
  %v445 = vpop.permute.xlu0 %444
  %446 = vrot.lane.b32.xlu0 %v415, 16
  %v447 = vpop.permute.xlu0 %446
  %448 = vrot.lane.b32.xlu0 %v416, 16
  %v449 = vpop.permute.xlu0 %448
  %450 = vrot.lane.b32.xlu0 %v417, 16
  %v451 = vpop.permute.xlu0 %450
  %v452 = vsel %vm83, %v449, %v451
  %v453 = vsel %vm83, %v447, %v449
  %v454 = vsel %vm83, %v445, %v447
  %v455 = vsel %vm83, %v451, %v445
  %v456 = vld [vmem:[%s88] sm:$0xf]
  %v458 = vperm.slane %v456, 0
  %v459 = vperm.slane %v456, 1
  %v460 = vperm.slane %v456, 2
  %v461 = vperm.slane %v456, 3
  %v466 = vmul.f32 %v455, %v458
  %v467 = vmul.f32 %v454, %v459
  %v468 = vmul.f32 %v453, %v460
  %v469 = vmul.f32 %v452, %v461
  %470 = vrot.lane.b32.xlu0 %v414, 15
  %v471 = vpop.permute.xlu0 %470
  %472 = vrot.lane.b32.xlu0 %v415, 15
  %v473 = vpop.permute.xlu0 %472
  %474 = vrot.lane.b32.xlu0 %v416, 15
  %v475 = vpop.permute.xlu0 %474
  %476 = vrot.lane.b32.xlu0 %v417, 15
  %v477 = vpop.permute.xlu0 %476
  %v478 = vsel %vm111, %v475, %v477
  %v479 = vsel %vm111, %v473, %v475
  %v480 = vsel %vm111, %v471, %v473
  %v481 = vsel %vm111, %v477, %v471
  %v482 = vld [vmem:[%s116] sm:$0xf]
  %v484 = vperm.slane %v482, 0
  %v485 = vperm.slane %v482, 1
  %v486 = vperm.slane %v482, 2
  %v487 = vperm.slane %v482, 3
  %v492 = vmul.f32 %v481, %v484
  %v493 = vmul.f32 %v480, %v485
  %v494 = vmul.f32 %v479, %v486
  %v495 = vmul.f32 %v478, %v487
  %496 = vrot.lane.b32.xlu0 %v414, 1
  %v497 = vpop.permute.xlu0 %496
  %498 = vrot.lane.b32.xlu0 %v415, 1
  %v499 = vpop.permute.xlu0 %498
  %500 = vrot.lane.b32.xlu0 %v416, 1
  %v501 = vpop.permute.xlu0 %500
  %502 = vrot.lane.b32.xlu0 %v417, 1
  %v503 = vpop.permute.xlu0 %502
  %v504 = vsel %vm139, %v501, %v503
  %v505 = vsel %vm139, %v499, %v501
  %v506 = vsel %vm139, %v497, %v499
  %v507 = vsel %vm139, %v503, %v497
  %v508 = vld [vmem:[%s144] sm:$0xf]
  %v510 = vperm.slane %v508, 0
  %v511 = vperm.slane %v508, 1
  %v512 = vperm.slane %v508, 2
  %v513 = vperm.slane %v508, 3
  %v518 = vmul.f32 %v507, %v510
  %v519 = vmul.f32 %v506, %v511
  %v520 = vmul.f32 %v505, %v512
  %v521 = vmul.f32 %v504, %v513
  %v522 = vld [vmem:[%s159] sm:$0xf]
  %v524 = vperm.slane %v522, 0
  %v525 = vperm.slane %v522, 1
  %v526 = vperm.slane %v522, 2
  %v527 = vperm.slane %v522, 3
  %v532 = vmul.f32 %v414, %v524
  %v533 = vmul.f32 %v415, %v525
  %v534 = vmul.f32 %v416, %v526
  %v535 = vmul.f32 %v417, %v527
  %536 = vrot.lane.b32.xlu0 %v414, 127
  %v537 = vpop.permute.xlu0 %536
  %538 = vrot.lane.b32.xlu0 %v415, 127
  %v539 = vpop.permute.xlu0 %538
  %540 = vrot.lane.b32.xlu0 %v416, 127
  %v541 = vpop.permute.xlu0 %540
  %542 = vrot.lane.b32.xlu0 %v417, 127
  %v543 = vpop.permute.xlu0 %542
  %v544 = vsel %vm182, %v541, %v543
  %v545 = vsel %vm182, %v539, %v541
  %v546 = vsel %vm182, %v537, %v539
  %v547 = vsel %vm182, %v543, %v537
  %v548 = vld [vmem:[%s187] sm:$0xf]
  %v550 = vperm.slane %v548, 0
  %v551 = vperm.slane %v548, 1
  %v552 = vperm.slane %v548, 2
  %v553 = vperm.slane %v548, 3
  %v558 = vmul.f32 %v546, %v550
  %v559 = vmul.f32 %v545, %v551
  %v560 = vmul.f32 %v544, %v552
  %v561 = vmul.f32 %v547, %v553
  %562 = vrot.lane.b32.xlu0 %v414, 113
  %v563 = vpop.permute.xlu0 %562
  %564 = vrot.lane.b32.xlu0 %v415, 113
  %v565 = vpop.permute.xlu0 %564
  %566 = vrot.lane.b32.xlu0 %v416, 113
  %v567 = vpop.permute.xlu0 %566
  %568 = vrot.lane.b32.xlu0 %v417, 113
  %v569 = vpop.permute.xlu0 %568
  %v570 = vsel %vm210, %v567, %v569
  %v571 = vsel %vm210, %v565, %v567
  %v572 = vsel %vm210, %v563, %v565
  %v573 = vsel %vm210, %v569, %v563
  %v574 = vld [vmem:[%s215] sm:$0xf]
  %v576 = vperm.slane %v574, 0
  %v577 = vperm.slane %v574, 1
  %v578 = vperm.slane %v574, 2
  %v579 = vperm.slane %v574, 3
  %v584 = vmul.f32 %v572, %v576
  %v585 = vmul.f32 %v571, %v577
  %v586 = vmul.f32 %v570, %v578
  %v587 = vmul.f32 %v573, %v579
  %588 = vrot.lane.b32.xlu0 %v414, 112
  %v589 = vpop.permute.xlu0 %588
  %590 = vrot.lane.b32.xlu0 %v415, 112
  %v591 = vpop.permute.xlu0 %590
  %592 = vrot.lane.b32.xlu0 %v416, 112
  %v593 = vpop.permute.xlu0 %592
  %594 = vrot.lane.b32.xlu0 %v417, 112
  %v595 = vpop.permute.xlu0 %594
  %v596 = vsel %vm238, %v593, %v595
  %v597 = vsel %vm238, %v591, %v593
  %v598 = vsel %vm238, %v589, %v591
  %v599 = vsel %vm238, %v595, %v589
  %v600 = vld [vmem:[%s243] sm:$0xf]
  %v602 = vperm.slane %v600, 0
  %v603 = vperm.slane %v600, 1
  %v604 = vperm.slane %v600, 2
  %v605 = vperm.slane %v600, 3
  %v610 = vmul.f32 %v598, %v602
  %v611 = vmul.f32 %v597, %v603
  %v612 = vmul.f32 %v596, %v604
  %v613 = vmul.f32 %v599, %v605
  %614 = vrot.lane.b32.xlu0 %v414, 111
  %v615 = vpop.permute.xlu0 %614
  %616 = vrot.lane.b32.xlu0 %v415, 111
  %v617 = vpop.permute.xlu0 %616
  %618 = vrot.lane.b32.xlu0 %v416, 111
  %v619 = vpop.permute.xlu0 %618
  %620 = vrot.lane.b32.xlu0 %v417, 111
  %v621 = vpop.permute.xlu0 %620
  %v622 = vsel %vm266, %v619, %v621
  %v623 = vsel %vm266, %v617, %v619
  %v624 = vsel %vm266, %v615, %v617
  %v625 = vsel %vm266, %v621, %v615
  %v626 = vld [vmem:[%s271] sm:$0xf]
  %v628 = vperm.slane %v626, 0
  %v629 = vperm.slane %v626, 1
  %v630 = vperm.slane %v626, 2
  %v631 = vperm.slane %v626, 3
  %v636 = vmul.f32 %v624, %v628
  %v637 = vmul.f32 %v623, %v629
  %v638 = vmul.f32 %v622, %v630
  %v639 = vmul.f32 %v625, %v631
  %v640 = vpack.c.bf16 %v466, %v440
  %v641 = vpack.c.bf16 %v467, %v441
  %v642 = vpack.c.bf16 %v468, %v442
  %v643 = vpack.c.bf16 %v469, %v443
  %v644 = vpack.c.bf16 %v518, %v492
  %v645 = vpack.c.bf16 %v519, %v493
  %v646 = vpack.c.bf16 %v520, %v494
  %v647 = vpack.c.bf16 %v521, %v495
  %v648 = vpack.c.bf16 %v558, %v532
  %v649 = vpack.c.bf16 %v559, %v533
  %v650 = vpack.c.bf16 %v560, %v534
  %v651 = vpack.c.bf16 %v561, %v535
  %v652 = vpack.c.bf16 %v610, %v584
  %v653 = vpack.c.bf16 %v611, %v585
  %v654 = vpack.c.bf16 %v612, %v586
  %v655 = vpack.c.bf16 %v613, %v587
  %v656 = vpack.c.bf16 %v636, %v636
  %v657 = vpack.c.bf16 %v637, %v637
  %v658 = vpack.c.bf16 %v638, %v638
  %v659 = vpack.c.bf16 %v639, %v639
  %v660 = vld [vmem:[%s4] sm:$0xf]
  %v662 = vsel %vm313, %v660, 0
  %v665 = vsel %vm317, %v656, 0
  %v668 = vsel %vm317, %v657, 0
  %v671 = vsel %vm317, %v658, 0
  %v674 = vsel %vm317, %v659, 0
  %676 = vmatpush.bf16.msra.mxu0 0
  %677 = vmatpush.bf16.msra.mxu0 0
  %678 = vmatpush.bf16.msra.mxu0 0
  %679 = vmatpush.bf16.msra.mxu0 %v665
  %680 = vmatpush.bf16.msra.mxu0 %v652
  %681 = vmatpush.bf16.msra.mxu0 %v648
  %682 = vmatpush.bf16.msra.mxu0 %v644
  %683 = vmatpush.bf16.msra.mxu0 %v640
  %684 = vmatmul.bf16.gmra.mxu0 %v662
  %v685 = vpop.f32.mrf.mxu0
  %v686 = vadd.f32 0.0, %v685
  %v687 = vpop.f32.mrf.mxu0
  %688 = vdwg.mxu0
  %689 = vmatpush.bf16.msra.mxu0 0
  %690 = vmatpush.bf16.msra.mxu0 0
  %691 = vmatpush.bf16.msra.mxu0 0
  %692 = vmatpush.bf16.msra.mxu0 %v668
  %693 = vmatpush.bf16.msra.mxu0 %v653
  %694 = vmatpush.bf16.msra.mxu0 %v649
  %695 = vmatpush.bf16.msra.mxu0 %v645
  %696 = vmatpush.bf16.msra.mxu0 %v641
  %697 = vmatmul.bf16.gmra.mxu0 %v662
  %v698 = vpop.f32.mrf.mxu0
  %v699 = vadd.f32 0.0, %v698
  %v700 = vpop.f32.mrf.mxu0
  %701 = vdwg.mxu0
  %702 = vmatpush.bf16.msra.mxu0 0
  %703 = vmatpush.bf16.msra.mxu0 0
  %704 = vmatpush.bf16.msra.mxu0 0
  %705 = vmatpush.bf16.msra.mxu0 %v671
  %706 = vmatpush.bf16.msra.mxu0 %v654
  %707 = vmatpush.bf16.msra.mxu0 %v650
  %708 = vmatpush.bf16.msra.mxu0 %v646
  %709 = vmatpush.bf16.msra.mxu0 %v642
  %710 = vmatmul.bf16.gmra.mxu0 %v662
  %v711 = vpop.f32.mrf.mxu0
  %v712 = vadd.f32 0.0, %v711
  %v713 = vpop.f32.mrf.mxu0
  %714 = vdwg.mxu0
  %715 = vmatpush.bf16.msra.mxu0 0
  %716 = vmatpush.bf16.msra.mxu0 0
  %717 = vmatpush.bf16.msra.mxu0 0
  %718 = vmatpush.bf16.msra.mxu0 %v674
  %719 = vmatpush.bf16.msra.mxu0 %v655
  %720 = vmatpush.bf16.msra.mxu0 %v651
  %721 = vmatpush.bf16.msra.mxu0 %v647
  %722 = vmatpush.bf16.msra.mxu0 %v643
  %723 = vmatmul.bf16.gmra.mxu0 %v662
  %v724 = vpop.f32.mrf.mxu0
  %v725 = vadd.f32 0.0, %v724
  %v726 = vpop.f32.mrf.mxu0
  %727 = vdwg.mxu0
  %728 = vst [vmem:[#allocation2 + $0x20] sm:$0xff] %v686
  %729 = vst [vmem:[#allocation2 + $0x28] sm:$0xff] %v699
  %730 = vst [vmem:[#allocation2 + $0x30] sm:$0xff] %v712
  %731 = vst [vmem:[#allocation2 + $0x38] sm:$0xff] %v725
  %v732 = vld [vmem:[#allocation2] sm:$0xff]
  %v733 = vld [vmem:[#allocation2 + $0x8] sm:$0xff]
  %v734 = vld [vmem:[#allocation2 + $0x10] sm:$0xff]
  %v735 = vld [vmem:[#allocation2 + $0x18] sm:$0xff]
  %v736 = vld [vmem:[#allocation2 + $0x20] sm:$0xff]
  %v737 = vld [vmem:[#allocation2 + $0x28] sm:$0xff]
  %v738 = vld [vmem:[#allocation2 + $0x30] sm:$0xff]
  %v739 = vld [vmem:[#allocation2 + $0x38] sm:$0xff]
  %v740 = vld [vmem:[%s8] sm:$0xff]
  %v741 = vld [vmem:[%s8 + $0x8] sm:$0xff]
  %743 = vset.pattern.permute.xlu0 0
  %744 = vperm.xlu0 %743, %v740
  %v745 = vpop.permute.xlu0 %744
  %748 = vset.pattern.permute.xlu0 0
  %749 = vperm.xlu0 %748, %v741
  %v750 = vpop.permute.xlu0 %749
  %v752 = vmul.f32 %v732, %v745
  %v753 = vmul.f32 %v733, %v745
  %v754 = vmul.f32 %v734, %v745
  %v755 = vmul.f32 %v735, %v745
  %v756 = vmul.f32 %v736, %v750
  %v757 = vmul.f32 %v737, %v750
  %v758 = vmul.f32 %v738, %v750
  %v759 = vmul.f32 %v739, %v750
  %v760 = vld [vmem:[%s9] sm:$0xff]
  %v761 = vld [vmem:[%s9 + $0x8] sm:$0xff]
  %763 = vset.pattern.permute.xlu0 0
  %764 = vperm.xlu0 %763, %v760
  %v765 = vpop.permute.xlu0 %764
  %768 = vset.pattern.permute.xlu0 0
  %769 = vperm.xlu0 %768, %v761
  %v770 = vpop.permute.xlu0 %769
  %v772 = vadd.f32 %v752, %v765
  %v773 = vadd.f32 %v753, %v765
  %v774 = vadd.f32 %v754, %v765
  %v775 = vadd.f32 %v755, %v765
  %v776 = vadd.f32 %v756, %v770
  %v777 = vadd.f32 %v757, %v770
  %v778 = vadd.f32 %v758, %v770
  %v779 = vadd.f32 %v759, %v770
  %v780 = vmax.f32 %v772, 0.0
  %v781 = vmax.f32 %v773, 0.0
  %v782 = vmax.f32 %v774, 0.0
  %v783 = vmax.f32 %v775, 0.0
  %v784 = vmax.f32 %v776, 0.0
  %v785 = vmax.f32 %v777, 0.0
  %v786 = vmax.f32 %v778, 0.0
  %v787 = vmax.f32 %v779, 0.0
  %788 = vrot.lane.b32.xlu0 %v780, 17
  %v789 = vpop.permute.xlu0 %788
  %790 = vrot.lane.b32.xlu0 %v784, 17
  %v791 = vpop.permute.xlu0 %790
  %792 = vrot.lane.b32.xlu0 %v781, 17
  %v793 = vpop.permute.xlu0 %792
  %794 = vrot.lane.b32.xlu0 %v785, 17
  %v795 = vpop.permute.xlu0 %794
  %796 = vrot.lane.b32.xlu0 %v782, 17
  %v797 = vpop.permute.xlu0 %796
  %798 = vrot.lane.b32.xlu0 %v786, 17
  %v799 = vpop.permute.xlu0 %798
  %800 = vrot.lane.b32.xlu0 %v783, 17
  %v801 = vpop.permute.xlu0 %800
  %802 = vrot.lane.b32.xlu0 %v787, 17
  %v803 = vpop.permute.xlu0 %802
  %v804 = vsel %vm56, %v797, %v801
  %v805 = vsel %vm56, %v799, %v803
  %v806 = vsel %vm56, %v793, %v797
  %v807 = vsel %vm56, %v795, %v799
  %v808 = vsel %vm56, %v789, %v793
  %v809 = vsel %vm56, %v791, %v795
  %v810 = vsel %vm56, %v801, %v789
  %v811 = vsel %vm56, %v803, %v791
  %v812 = vld [vmem:[%s1] sm:$0xf]
  %v814 = vperm.slane %v812, 0
  %v815 = vperm.slane %v812, 1
  %v816 = vperm.slane %v812, 2
  %v817 = vperm.slane %v812, 3
  %v822 = vmul.f32 %v810, %v814
  %v823 = vmul.f32 %v808, %v815
  %v824 = vmul.f32 %v806, %v816
  %v825 = vmul.f32 %v804, %v817
  %v826 = vmul.f32 %v811, %v814
  %v827 = vmul.f32 %v809, %v815
  %v828 = vmul.f32 %v807, %v816
  %v829 = vmul.f32 %v805, %v817
  %830 = vrot.lane.b32.xlu0 %v780, 16
  %v831 = vpop.permute.xlu0 %830
  %832 = vrot.lane.b32.xlu0 %v784, 16
  %v833 = vpop.permute.xlu0 %832
  %834 = vrot.lane.b32.xlu0 %v781, 16
  %v835 = vpop.permute.xlu0 %834
  %836 = vrot.lane.b32.xlu0 %v785, 16
  %v837 = vpop.permute.xlu0 %836
  %838 = vrot.lane.b32.xlu0 %v782, 16
  %v839 = vpop.permute.xlu0 %838
  %840 = vrot.lane.b32.xlu0 %v786, 16
  %v841 = vpop.permute.xlu0 %840
  %842 = vrot.lane.b32.xlu0 %v783, 16
  %v843 = vpop.permute.xlu0 %842
  %844 = vrot.lane.b32.xlu0 %v787, 16
  %v845 = vpop.permute.xlu0 %844
  %v846 = vsel %vm83, %v839, %v843
  %v847 = vsel %vm83, %v841, %v845
  %v848 = vsel %vm83, %v835, %v839
  %v849 = vsel %vm83, %v837, %v841
  %v850 = vsel %vm83, %v831, %v835
  %v851 = vsel %vm83, %v833, %v837
  %v852 = vsel %vm83, %v843, %v831
  %v853 = vsel %vm83, %v845, %v833
  %v854 = vld [vmem:[%s88] sm:$0xf]
  %v856 = vperm.slane %v854, 0
  %v857 = vperm.slane %v854, 1
  %v858 = vperm.slane %v854, 2
  %v859 = vperm.slane %v854, 3
  %v864 = vmul.f32 %v852, %v856
  %v865 = vmul.f32 %v850, %v857
  %v866 = vmul.f32 %v848, %v858
  %v867 = vmul.f32 %v846, %v859
  %v868 = vmul.f32 %v853, %v856
  %v869 = vmul.f32 %v851, %v857
  %v870 = vmul.f32 %v849, %v858
  %v871 = vmul.f32 %v847, %v859
  %872 = vrot.lane.b32.xlu0 %v780, 15
  %v873 = vpop.permute.xlu0 %872
  %874 = vrot.lane.b32.xlu0 %v784, 15
  %v875 = vpop.permute.xlu0 %874
  %876 = vrot.lane.b32.xlu0 %v781, 15
  %v877 = vpop.permute.xlu0 %876
  %878 = vrot.lane.b32.xlu0 %v785, 15
  %v879 = vpop.permute.xlu0 %878
  %880 = vrot.lane.b32.xlu0 %v782, 15
  %v881 = vpop.permute.xlu0 %880
  %882 = vrot.lane.b32.xlu0 %v786, 15
  %v883 = vpop.permute.xlu0 %882
  %884 = vrot.lane.b32.xlu0 %v783, 15
  %v885 = vpop.permute.xlu0 %884
  %886 = vrot.lane.b32.xlu0 %v787, 15
  %v887 = vpop.permute.xlu0 %886
  %v888 = vsel %vm111, %v881, %v885
  %v889 = vsel %vm111, %v883, %v887
  %v890 = vsel %vm111, %v877, %v881
  %v891 = vsel %vm111, %v879, %v883
  %v892 = vsel %vm111, %v873, %v877
  %v893 = vsel %vm111, %v875, %v879
  %v894 = vsel %vm111, %v885, %v873
  %v895 = vsel %vm111, %v887, %v875
  %v896 = vld [vmem:[%s116] sm:$0xf]
  %v898 = vperm.slane %v896, 0
  %v899 = vperm.slane %v896, 1
  %v900 = vperm.slane %v896, 2
  %v901 = vperm.slane %v896, 3
  %v906 = vmul.f32 %v894, %v898
  %v907 = vmul.f32 %v892, %v899
  %v908 = vmul.f32 %v890, %v900
  %v909 = vmul.f32 %v888, %v901
  %v910 = vmul.f32 %v895, %v898
  %v911 = vmul.f32 %v893, %v899
  %v912 = vmul.f32 %v891, %v900
  %v913 = vmul.f32 %v889, %v901
  %914 = vrot.lane.b32.xlu0 %v780, 1
  %v915 = vpop.permute.xlu0 %914
  %916 = vrot.lane.b32.xlu0 %v784, 1
  %v917 = vpop.permute.xlu0 %916
  %918 = vrot.lane.b32.xlu0 %v781, 1
  %v919 = vpop.permute.xlu0 %918
  %920 = vrot.lane.b32.xlu0 %v785, 1
  %v921 = vpop.permute.xlu0 %920
  %922 = vrot.lane.b32.xlu0 %v782, 1
  %v923 = vpop.permute.xlu0 %922
  %924 = vrot.lane.b32.xlu0 %v786, 1
  %v925 = vpop.permute.xlu0 %924
  %926 = vrot.lane.b32.xlu0 %v783, 1
  %v927 = vpop.permute.xlu0 %926
  %928 = vrot.lane.b32.xlu0 %v787, 1
  %v929 = vpop.permute.xlu0 %928
  %v930 = vsel %vm139, %v923, %v927
  %v931 = vsel %vm139, %v925, %v929
  %v932 = vsel %vm139, %v919, %v923
  %v933 = vsel %vm139, %v921, %v925
  %v934 = vsel %vm139, %v915, %v919
  %v935 = vsel %vm139, %v917, %v921
  %v936 = vsel %vm139, %v927, %v915
  %v937 = vsel %vm139, %v929, %v917
  %v938 = vld [vmem:[%s144] sm:$0xf]
  %v940 = vperm.slane %v938, 0
  %v941 = vperm.slane %v938, 1
  %v942 = vperm.slane %v938, 2
  %v943 = vperm.slane %v938, 3
  %v948 = vmul.f32 %v936, %v940
  %v949 = vmul.f32 %v934, %v941
  %v950 = vmul.f32 %v932, %v942
  %v951 = vmul.f32 %v930, %v943
  %v952 = vmul.f32 %v937, %v940
  %v953 = vmul.f32 %v935, %v941
  %v954 = vmul.f32 %v933, %v942
  %v955 = vmul.f32 %v931, %v943
  %v956 = vld [vmem:[%s159] sm:$0xf]
  %v958 = vperm.slane %v956, 0
  %v959 = vperm.slane %v956, 1
  %v960 = vperm.slane %v956, 2
  %v961 = vperm.slane %v956, 3
  %v966 = vmul.f32 %v780, %v958
  %v967 = vmul.f32 %v781, %v959
  %v968 = vmul.f32 %v782, %v960
  %v969 = vmul.f32 %v783, %v961
  %v970 = vmul.f32 %v784, %v958
  %v971 = vmul.f32 %v785, %v959
  %v972 = vmul.f32 %v786, %v960
  %v973 = vmul.f32 %v787, %v961
  %974 = vrot.lane.b32.xlu0 %v780, 127
  %v975 = vpop.permute.xlu0 %974
  %976 = vrot.lane.b32.xlu0 %v784, 127
  %v977 = vpop.permute.xlu0 %976
  %978 = vrot.lane.b32.xlu0 %v781, 127
  %v979 = vpop.permute.xlu0 %978
  %980 = vrot.lane.b32.xlu0 %v785, 127
  %v981 = vpop.permute.xlu0 %980
  %982 = vrot.lane.b32.xlu0 %v782, 127
  %v983 = vpop.permute.xlu0 %982
  %984 = vrot.lane.b32.xlu0 %v786, 127
  %v985 = vpop.permute.xlu0 %984
  %986 = vrot.lane.b32.xlu0 %v783, 127
  %v987 = vpop.permute.xlu0 %986
  %988 = vrot.lane.b32.xlu0 %v787, 127
  %v989 = vpop.permute.xlu0 %988
  %v990 = vsel %vm182, %v983, %v987
  %v991 = vsel %vm182, %v985, %v989
  %v992 = vsel %vm182, %v979, %v983
  %v993 = vsel %vm182, %v981, %v985
  %v994 = vsel %vm182, %v975, %v979
  %v995 = vsel %vm182, %v977, %v981
  %v996 = vsel %vm182, %v987, %v975
  %v997 = vsel %vm182, %v989, %v977
  %v998 = vld [vmem:[%s187] sm:$0xf]
  %v1000 = vperm.slane %v998, 0
  %v1001 = vperm.slane %v998, 1
  %v1002 = vperm.slane %v998, 2
  %v1003 = vperm.slane %v998, 3
  %v1008 = vmul.f32 %v994, %v1000
  %v1009 = vmul.f32 %v992, %v1001
  %v1010 = vmul.f32 %v990, %v1002
  %v1011 = vmul.f32 %v996, %v1003
  %v1012 = vmul.f32 %v995, %v1000
  %v1013 = vmul.f32 %v993, %v1001
  %v1014 = vmul.f32 %v991, %v1002
  %v1015 = vmul.f32 %v997, %v1003
  %1016 = vrot.lane.b32.xlu0 %v780, 113
  %v1017 = vpop.permute.xlu0 %1016
  %1018 = vrot.lane.b32.xlu0 %v784, 113
  %v1019 = vpop.permute.xlu0 %1018
  %1020 = vrot.lane.b32.xlu0 %v781, 113
  %v1021 = vpop.permute.xlu0 %1020
  %1022 = vrot.lane.b32.xlu0 %v785, 113
  %v1023 = vpop.permute.xlu0 %1022
  %1024 = vrot.lane.b32.xlu0 %v782, 113
  %v1025 = vpop.permute.xlu0 %1024
  %1026 = vrot.lane.b32.xlu0 %v786, 113
  %v1027 = vpop.permute.xlu0 %1026
  %1028 = vrot.lane.b32.xlu0 %v783, 113
  %v1029 = vpop.permute.xlu0 %1028
  %1030 = vrot.lane.b32.xlu0 %v787, 113
  %v1031 = vpop.permute.xlu0 %1030
  %v1032 = vsel %vm210, %v1025, %v1029
  %v1033 = vsel %vm210, %v1027, %v1031
  %v1034 = vsel %vm210, %v1021, %v1025
  %v1035 = vsel %vm210, %v1023, %v1027
  %v1036 = vsel %vm210, %v1017, %v1021
  %v1037 = vsel %vm210, %v1019, %v1023
  %v1038 = vsel %vm210, %v1029, %v1017
  %v1039 = vsel %vm210, %v1031, %v1019
  %v1040 = vld [vmem:[%s215] sm:$0xf]
  %v1042 = vperm.slane %v1040, 0
  %v1043 = vperm.slane %v1040, 1
  %v1044 = vperm.slane %v1040, 2
  %v1045 = vperm.slane %v1040, 3
  %v1050 = vmul.f32 %v1036, %v1042
  %v1051 = vmul.f32 %v1034, %v1043
  %v1052 = vmul.f32 %v1032, %v1044
  %v1053 = vmul.f32 %v1038, %v1045
  %v1054 = vmul.f32 %v1037, %v1042
  %v1055 = vmul.f32 %v1035, %v1043
  %v1056 = vmul.f32 %v1033, %v1044
  %v1057 = vmul.f32 %v1039, %v1045
  %1058 = vrot.lane.b32.xlu0 %v780, 112
  %v1059 = vpop.permute.xlu0 %1058
  %1060 = vrot.lane.b32.xlu0 %v784, 112
  %v1061 = vpop.permute.xlu0 %1060
  %1062 = vrot.lane.b32.xlu0 %v781, 112
  %v1063 = vpop.permute.xlu0 %1062
  %1064 = vrot.lane.b32.xlu0 %v785, 112
  %v1065 = vpop.permute.xlu0 %1064
  %1066 = vrot.lane.b32.xlu0 %v782, 112
  %v1067 = vpop.permute.xlu0 %1066
  %1068 = vrot.lane.b32.xlu0 %v786, 112
  %v1069 = vpop.permute.xlu0 %1068
  %1070 = vrot.lane.b32.xlu0 %v783, 112
  %v1071 = vpop.permute.xlu0 %1070
  %1072 = vrot.lane.b32.xlu0 %v787, 112
  %v1073 = vpop.permute.xlu0 %1072
  %v1074 = vsel %vm238, %v1067, %v1071
  %v1075 = vsel %vm238, %v1069, %v1073
  %v1076 = vsel %vm238, %v1063, %v1067
  %v1077 = vsel %vm238, %v1065, %v1069
  %v1078 = vsel %vm238, %v1059, %v1063
  %v1079 = vsel %vm238, %v1061, %v1065
  %v1080 = vsel %vm238, %v1071, %v1059
  %v1081 = vsel %vm238, %v1073, %v1061
  %v1082 = vld [vmem:[%s243] sm:$0xf]
  %v1084 = vperm.slane %v1082, 0
  %v1085 = vperm.slane %v1082, 1
  %v1086 = vperm.slane %v1082, 2
  %v1087 = vperm.slane %v1082, 3
  %v1092 = vmul.f32 %v1078, %v1084
  %v1093 = vmul.f32 %v1076, %v1085
  %v1094 = vmul.f32 %v1074, %v1086
  %v1095 = vmul.f32 %v1080, %v1087
  %v1096 = vmul.f32 %v1079, %v1084
  %v1097 = vmul.f32 %v1077, %v1085
  %v1098 = vmul.f32 %v1075, %v1086
  %v1099 = vmul.f32 %v1081, %v1087
  %1100 = vrot.lane.b32.xlu0 %v780, 111
  %v1101 = vpop.permute.xlu0 %1100
  %1102 = vrot.lane.b32.xlu0 %v784, 111
  %v1103 = vpop.permute.xlu0 %1102
  %1104 = vrot.lane.b32.xlu0 %v781, 111
  %v1105 = vpop.permute.xlu0 %1104
  %1106 = vrot.lane.b32.xlu0 %v785, 111
  %v1107 = vpop.permute.xlu0 %1106
  %1108 = vrot.lane.b32.xlu0 %v782, 111
  %v1109 = vpop.permute.xlu0 %1108
  %1110 = vrot.lane.b32.xlu0 %v786, 111
  %v1111 = vpop.permute.xlu0 %1110
  %1112 = vrot.lane.b32.xlu0 %v783, 111
  %v1113 = vpop.permute.xlu0 %1112
  %1114 = vrot.lane.b32.xlu0 %v787, 111
  %v1115 = vpop.permute.xlu0 %1114
  %v1116 = vsel %vm266, %v1109, %v1113
  %v1117 = vsel %vm266, %v1111, %v1115
  %v1118 = vsel %vm266, %v1105, %v1109
  %v1119 = vsel %vm266, %v1107, %v1111
  %v1120 = vsel %vm266, %v1101, %v1105
  %v1121 = vsel %vm266, %v1103, %v1107
  %v1122 = vsel %vm266, %v1113, %v1101
  %v1123 = vsel %vm266, %v1115, %v1103
  %v1124 = vld [vmem:[%s271] sm:$0xf]
  %v1126 = vperm.slane %v1124, 0
  %v1127 = vperm.slane %v1124, 1
  %v1128 = vperm.slane %v1124, 2
  %v1129 = vperm.slane %v1124, 3
  %v1134 = vmul.f32 %v1120, %v1126
  %v1135 = vmul.f32 %v1118, %v1127
  %v1136 = vmul.f32 %v1116, %v1128
  %v1137 = vmul.f32 %v1122, %v1129
  %v1138 = vmul.f32 %v1121, %v1126
  %v1139 = vmul.f32 %v1119, %v1127
  %v1140 = vmul.f32 %v1117, %v1128
  %v1141 = vmul.f32 %v1123, %v1129
  %v1142 = vpack.c.bf16 %v826, %v822
  %v1143 = vpack.c.bf16 %v827, %v823
  %v1144 = vpack.c.bf16 %v828, %v824
  %v1145 = vpack.c.bf16 %v829, %v825
  %v1146 = vpack.c.bf16 %v868, %v864
  %v1147 = vpack.c.bf16 %v869, %v865
  %v1148 = vpack.c.bf16 %v870, %v866
  %v1149 = vpack.c.bf16 %v871, %v867
  %v1150 = vpack.c.bf16 %v910, %v906
  %v1151 = vpack.c.bf16 %v911, %v907
  %v1152 = vpack.c.bf16 %v912, %v908
  %v1153 = vpack.c.bf16 %v913, %v909
  %v1154 = vpack.c.bf16 %v952, %v948
  %v1155 = vpack.c.bf16 %v953, %v949
  %v1156 = vpack.c.bf16 %v954, %v950
  %v1157 = vpack.c.bf16 %v955, %v951
  %v1158 = vpack.c.bf16 %v970, %v966
  %v1159 = vpack.c.bf16 %v971, %v967
  %v1160 = vpack.c.bf16 %v972, %v968
  %v1161 = vpack.c.bf16 %v973, %v969
  %v1162 = vpack.c.bf16 %v1012, %v1008
  %v1163 = vpack.c.bf16 %v1013, %v1009
  %v1164 = vpack.c.bf16 %v1014, %v1010
  %v1165 = vpack.c.bf16 %v1015, %v1011
  %v1166 = vpack.c.bf16 %v1054, %v1050
  %v1167 = vpack.c.bf16 %v1055, %v1051
  %v1168 = vpack.c.bf16 %v1056, %v1052
  %v1169 = vpack.c.bf16 %v1057, %v1053
  %v1170 = vpack.c.bf16 %v1096, %v1092
  %v1171 = vpack.c.bf16 %v1097, %v1093
  %v1172 = vpack.c.bf16 %v1098, %v1094
  %v1173 = vpack.c.bf16 %v1099, %v1095
  %v1174 = vpack.c.bf16 %v1138, %v1134
  %v1175 = vpack.c.bf16 %v1139, %v1135
  %v1176 = vpack.c.bf16 %v1140, %v1136
  %v1177 = vpack.c.bf16 %v1141, %v1137
  %v1178 = vld [vmem:[%s7] sm:$0xff]
  %v1180 = vunpack.c.l.b16 %v1178
  %v1181 = vunpack.c.h.b16 %v1178
  %v1182 = vpack.c.b16 %v1180, %v1180
  %v1183 = vpack.c.b16 %v1181, %v1181
  %vm1185 = vcmask 130048
  %v1187 = vsel %vm1185, %v1183, 0
  %1189 = vmatpush.bf16.msra.mxu0 %v1170
  %1190 = vmatpush.bf16.msra.mxu0 %v1166
  %1191 = vmatpush.bf16.msra.mxu0 %v1162
  %1192 = vmatpush.bf16.msra.mxu0 %v1158
  %1193 = vmatpush.bf16.msra.mxu0 %v1154
  %1194 = vmatpush.bf16.msra.mxu0 %v1150
  %1195 = vmatpush.bf16.msra.mxu0 %v1146
  %1196 = vmatpush.bf16.msra.mxu0 %v1142
  %1197 = vmatmul.bf16.gmra.mxu0 %v1182
  %v1198 = vpop.f32.mrf.mxu0
  %v1199 = vadd.f32 0.0, %v1198
  %v1200 = vpop.f32.mrf.mxu0
  %1201 = vdwg.mxu0
  %1202 = vmatpush.bf16.msra.mxu0 0
  %1203 = vmatpush.bf16.msra.mxu0 0
  %1204 = vmatpush.bf16.msra.mxu0 0
  %1205 = vmatpush.bf16.msra.mxu0 0
  %1206 = vmatpush.bf16.msra.mxu0 0
  %1207 = vmatpush.bf16.msra.mxu0 0
  %1208 = vmatpush.bf16.msra.mxu0 0
  %1209 = vmatpush.bf16.msra.mxu0 %v1174
  %1210 = vmatmul.bf16.gmra.mxu0 %v1187
  %v1211 = vpop.f32.mrf.mxu0
  %v1212 = vadd.f32 %v1199, %v1211
  %v1213 = vpop.f32.mrf.mxu0
  %1214 = vdwg.mxu0
  %1215 = vmatpush.bf16.msra.mxu0 %v1171
  %1216 = vmatpush.bf16.msra.mxu0 %v1167
  %1217 = vmatpush.bf16.msra.mxu0 %v1163
  %1218 = vmatpush.bf16.msra.mxu0 %v1159
  %1219 = vmatpush.bf16.msra.mxu0 %v1155
  %1220 = vmatpush.bf16.msra.mxu0 %v1151
  %1221 = vmatpush.bf16.msra.mxu0 %v1147
  %1222 = vmatpush.bf16.msra.mxu0 %v1143
  %1223 = vmatmul.bf16.gmra.mxu0 %v1182
  %v1224 = vpop.f32.mrf.mxu0
  %v1225 = vadd.f32 0.0, %v1224
  %v1226 = vpop.f32.mrf.mxu0
  %1227 = vdwg.mxu0
  %1228 = vmatpush.bf16.msra.mxu0 0
  %1229 = vmatpush.bf16.msra.mxu0 0
  %1230 = vmatpush.bf16.msra.mxu0 0
  %1231 = vmatpush.bf16.msra.mxu0 0
  %1232 = vmatpush.bf16.msra.mxu0 0
  %1233 = vmatpush.bf16.msra.mxu0 0
  %1234 = vmatpush.bf16.msra.mxu0 0
  %1235 = vmatpush.bf16.msra.mxu0 %v1175
  %1236 = vmatmul.bf16.gmra.mxu0 %v1187
  %v1237 = vpop.f32.mrf.mxu0
  %v1238 = vadd.f32 %v1225, %v1237
  %v1239 = vpop.f32.mrf.mxu0
  %1240 = vdwg.mxu0
  %1241 = vmatpush.bf16.msra.mxu0 %v1172
  %1242 = vmatpush.bf16.msra.mxu0 %v1168
  %1243 = vmatpush.bf16.msra.mxu0 %v1164
  %1244 = vmatpush.bf16.msra.mxu0 %v1160
  %1245 = vmatpush.bf16.msra.mxu0 %v1156
  %1246 = vmatpush.bf16.msra.mxu0 %v1152
  %1247 = vmatpush.bf16.msra.mxu0 %v1148
  %1248 = vmatpush.bf16.msra.mxu0 %v1144
  %1249 = vmatmul.bf16.gmra.mxu0 %v1182
  %v1250 = vpop.f32.mrf.mxu0
  %v1251 = vadd.f32 0.0, %v1250
  %v1252 = vpop.f32.mrf.mxu0
  %1253 = vdwg.mxu0
  %1254 = vmatpush.bf16.msra.mxu0 0
  %1255 = vmatpush.bf16.msra.mxu0 0
  %1256 = vmatpush.bf16.msra.mxu0 0
  %1257 = vmatpush.bf16.msra.mxu0 0
  %1258 = vmatpush.bf16.msra.mxu0 0
  %1259 = vmatpush.bf16.msra.mxu0 0
  %1260 = vmatpush.bf16.msra.mxu0 0
  %1261 = vmatpush.bf16.msra.mxu0 %v1176
  %1262 = vmatmul.bf16.gmra.mxu0 %v1187
  %v1263 = vpop.f32.mrf.mxu0
  %v1264 = vadd.f32 %v1251, %v1263
  %v1265 = vpop.f32.mrf.mxu0
  %1266 = vdwg.mxu0
  %1267 = vmatpush.bf16.msra.mxu0 %v1173
  %1268 = vmatpush.bf16.msra.mxu0 %v1169
  %1269 = vmatpush.bf16.msra.mxu0 %v1165
  %1270 = vmatpush.bf16.msra.mxu0 %v1161
  %1271 = vmatpush.bf16.msra.mxu0 %v1157
  %1272 = vmatpush.bf16.msra.mxu0 %v1153
  %1273 = vmatpush.bf16.msra.mxu0 %v1149
  %1274 = vmatpush.bf16.msra.mxu0 %v1145
  %1275 = vmatmul.bf16.gmra.mxu0 %v1182
  %v1276 = vpop.f32.mrf.mxu0
  %v1277 = vadd.f32 0.0, %v1276
  %v1278 = vpop.f32.mrf.mxu0
  %1279 = vdwg.mxu0
  %1280 = vmatpush.bf16.msra.mxu0 0
  %1281 = vmatpush.bf16.msra.mxu0 0
  %1282 = vmatpush.bf16.msra.mxu0 0
  %1283 = vmatpush.bf16.msra.mxu0 0
  %1284 = vmatpush.bf16.msra.mxu0 0
  %1285 = vmatpush.bf16.msra.mxu0 0
  %1286 = vmatpush.bf16.msra.mxu0 0
  %1287 = vmatpush.bf16.msra.mxu0 %v1177
  %1288 = vmatmul.bf16.gmra.mxu0 %v1187
  %v1289 = vpop.f32.mrf.mxu0
  %v1290 = vadd.f32 %v1277, %v1289
  %v1291 = vpop.f32.mrf.mxu0
  %1292 = vdwg.mxu0
  %1293 = vst [vmem:[#allocation2 + $0x40] sm:$0xff] %v1212
  %1294 = vst [vmem:[#allocation2 + $0x48] sm:$0xff] %v1238
  %1295 = vst [vmem:[#allocation2 + $0x50] sm:$0xff] %v1264
  %1296 = vst [vmem:[#allocation2 + $0x58] sm:$0xff] %v1290
  %v1297 = vld [vmem:[#allocation2] sm:$0xff]
  %v1298 = vld [vmem:[#allocation2 + $0x8] sm:$0xff]
  %v1299 = vld [vmem:[#allocation2 + $0x10] sm:$0xff]
  %v1300 = vld [vmem:[#allocation2 + $0x18] sm:$0xff]
  %v1301 = vld [vmem:[#allocation2 + $0x20] sm:$0xff]
  %v1302 = vld [vmem:[#allocation2 + $0x28] sm:$0xff]
  %v1303 = vld [vmem:[#allocation2 + $0x30] sm:$0xff]
  %v1304 = vld [vmem:[#allocation2 + $0x38] sm:$0xff]
  %v1305 = vld [vmem:[#allocation2 + $0x40] sm:$0xff]
  %v1306 = vld [vmem:[#allocation2 + $0x48] sm:$0xff]
  %v1307 = vld [vmem:[#allocation2 + $0x50] sm:$0xff]
  %v1308 = vld [vmem:[#allocation2 + $0x58] sm:$0xff]
  %v1309 = vld [vmem:[%s10] sm:$0xff]
  %v1310 = vld [vmem:[%s10 + $0x8] sm:$0xff]
  %v1311 = vld [vmem:[%s10 + $0x10] sm:$0xff]
  %1313 = vset.pattern.permute.xlu0 0
  %1314 = vperm.xlu0 %1313, %v1309
  %v1315 = vpop.permute.xlu0 %1314
  %1318 = vset.pattern.permute.xlu0 0
  %1319 = vperm.xlu0 %1318, %v1310
  %v1320 = vpop.permute.xlu0 %1319
  %1323 = vset.pattern.permute.xlu0 0
  %1324 = vperm.xlu0 %1323, %v1311
  %v1325 = vpop.permute.xlu0 %1324
  %v1327 = vmul.f32 %v1297, %v1315
  %v1328 = vmul.f32 %v1298, %v1315
  %v1329 = vmul.f32 %v1299, %v1315
  %v1330 = vmul.f32 %v1300, %v1315
  %v1331 = vmul.f32 %v1301, %v1320
  %v1332 = vmul.f32 %v1302, %v1320
  %v1333 = vmul.f32 %v1303, %v1320
  %v1334 = vmul.f32 %v1304, %v1320
  %v1335 = vmul.f32 %v1305, %v1325
  %v1336 = vmul.f32 %v1306, %v1325
  %v1337 = vmul.f32 %v1307, %v1325
  %v1338 = vmul.f32 %v1308, %v1325
  %v1339 = vld [vmem:[%s11] sm:$0xff]
  %v1340 = vld [vmem:[%s11 + $0x8] sm:$0xff]
  %v1341 = vld [vmem:[%s11 + $0x10] sm:$0xff]
  %1343 = vset.pattern.permute.xlu0 0
  %1344 = vperm.xlu0 %1343, %v1339
  %v1345 = vpop.permute.xlu0 %1344
  %1348 = vset.pattern.permute.xlu0 0
  %1349 = vperm.xlu0 %1348, %v1340
  %v1350 = vpop.permute.xlu0 %1349
  %1353 = vset.pattern.permute.xlu0 0
  %1354 = vperm.xlu0 %1353, %v1341
  %v1355 = vpop.permute.xlu0 %1354
  %v1357 = vadd.f32 %v1327, %v1345
  %v1358 = vadd.f32 %v1328, %v1345
  %v1359 = vadd.f32 %v1329, %v1345
  %v1360 = vadd.f32 %v1330, %v1345
  %v1361 = vadd.f32 %v1331, %v1350
  %v1362 = vadd.f32 %v1332, %v1350
  %v1363 = vadd.f32 %v1333, %v1350
  %v1364 = vadd.f32 %v1334, %v1350
  %v1365 = vadd.f32 %v1335, %v1355
  %v1366 = vadd.f32 %v1336, %v1355
  %v1367 = vadd.f32 %v1337, %v1355
  %v1368 = vadd.f32 %v1338, %v1355
  %v1369 = vmax.f32 %v1357, 0.0
  %v1370 = vmax.f32 %v1358, 0.0
  %v1371 = vmax.f32 %v1359, 0.0
  %v1372 = vmax.f32 %v1360, 0.0
  %v1373 = vmax.f32 %v1361, 0.0
  %v1374 = vmax.f32 %v1362, 0.0
  %v1375 = vmax.f32 %v1363, 0.0
  %v1376 = vmax.f32 %v1364, 0.0
  %v1377 = vmax.f32 %v1365, 0.0
  %v1378 = vmax.f32 %v1366, 0.0
  %v1379 = vmax.f32 %v1367, 0.0
  %v1380 = vmax.f32 %v1368, 0.0
  %1381 = vst [vmem:[%s12] sm:$0xff] %v1369
  %1382 = vst [vmem:[%s12 + $0x8] sm:$0xff] %v1370
  %1383 = vst [vmem:[%s12 + $0x10] sm:$0xff] %v1371
  %1384 = vst [vmem:[%s12 + $0x18] sm:$0xff] %v1372
  %1385 = vst [vmem:[%s12 + $0x20] sm:$0xff] %v1373
  %1386 = vst [vmem:[%s12 + $0x28] sm:$0xff] %v1374
  %1387 = vst [vmem:[%s12 + $0x30] sm:$0xff] %v1375
  %1388 = vst [vmem:[%s12 + $0x38] sm:$0xff] %v1376
  %1389 = vst [vmem:[%s12 + $0x40] sm:$0xff] %v1377
  %1390 = vst [vmem:[%s12 + $0x48] sm:$0xff] %v1378
  %1391 = vst [vmem:[%s12 + $0x50] sm:$0xff] %v1379
  %1392 = vst [vmem:[%s12 + $0x58] sm:$0xff] %v1380
  // Predicated region
  $region50: #{densenet_last_layer_forward.1} parent=0 // pred_check
    _
  $region51: #{densenet_last_layer_forward.1} parent=0 // pred_check_branch
    %1394 = sbr.rel (0) target = $region53
  $region52: #{densenet_last_layer_forward.1} parent=0 // pred_region
    _
  $region53: #{densenet_last_layer_forward.1} parent=0 // pred_fallthru
    _
  // Predicated region
  $region54: #{densenet_last_layer_forward.1} parent=0 // pred_check
    _
  $region55: #{densenet_last_layer_forward.1} parent=0 // pred_check_branch
    %1396 = sbr.rel (0) target = $region57
  $region56: #{densenet_last_layer_forward.1} parent=0 // pred_region
    _
  $region57: #{densenet_last_layer_forward.1} parent=0 // pred_fallthru
    _

</llo_original>
